<compile_context>
chip_gen: v7x
topology: tpu7x:2x2x1
jax: 0.10.0
libtpu: 0.0.40
codegen_flags: <defaults>
</compile_context>

<pallas_src>
import jax
import jax.numpy as jnp
from jax import lax
from jax.experimental import pallas as pl
from jax.experimental.pallas import tpu as pltpu


def _largest_divisor_leq(n, cap):
    cap = max(1, min(int(cap), int(n)))
    for d in range(cap, 0, -1):
        if n % d == 0:
            return d
    return 1


# ----------------------------------------------------------------------------
# Fused nearest-2x upsample + 3x3/stride-1/pad-1 conv (phase decomposition).
#
# For output pixel (2h+dh, 2w+dw):
#   y = sum_{kh,kw} K[kh,kw] * up[2h+dh+kh-1, 2w+dw+kw-1],  up[r,c] = x[r//2, c//2]
# which collapses to 4 taps per phase on the original-resolution input with
# pre-combined weights (done once in the wrapper).
# ----------------------------------------------------------------------------
def _up2x_conv3x3_kernel(xc_ref, xt_ref, xb_ref, w_ref, b_ref, o_ref):
    # xc_ref: (1, TH, W, Cin)    current input row tile
    # xt_ref: (1, 1,  W, Cin)    input row just above the tile (clamped)
    # xb_ref: (1, 1,  W, Cin)    input row just below the tile (clamped)
    # w_ref : (4, 4, Cin, Cout)  pre-combined weights [phase, tap]
    # b_ref : (1, Cout)
    # o_ref : (1, TH, 2, W, 2*Cout)  output viewed as (N, H, 2, W, 2*Cout)
    i = pl.program_id(1)
    n_h = pl.num_programs(1)
    TH, W = xc_ref.shape[1], xc_ref.shape[2]
    dt = xc_ref.dtype

    xc = xc_ref[0]                                    # (TH, W, Cin)
    top_ok = (i > 0).astype(dt)                       # zero halo at image top
    bot_ok = (i < n_h - 1).astype(dt)                 # zero halo at image bottom
    xt = xt_ref[0] * top_ok                           # (1, W, Cin)
    xb = xb_ref[0] * bot_ok                           # (1, W, Cin)

    # Row above / below each tile row (H halo handled with two 1-row blocks).
    if TH > 1:
        xp = jnp.concatenate([xt, xc[:-1]], axis=0)   # (TH, W, Cin)
        xn = jnp.concatenate([xc[1:], xb], axis=0)    # (TH, W, Cin)
    else:
        xp, xn = xt, xb

    # Column shifts along W (sublane axis): XLU roll + boundary zero mask.
    col = lax.broadcasted_iota(jnp.int32, (1, W, 1), 1)
    mask_l = col == 0
    mask_r = col == (W - 1)
    zero = jnp.zeros((), dt)

    def left(a):   # left(a)[..., w, :] == a[..., w-1, :]  (zero pad at w == 0)
        return jnp.where(mask_l, zero, pltpu.roll(a, shift=1, axis=1))

    def right(a):  # right(a)[..., w, :] == a[..., w+1, :] (zero pad at w == W-1)
        return jnp.where(mask_r, zero, pltpu.roll(a, shift=W - 1, axis=1))

    def tap(a, p, t):
        # (TH, W, Cin) x (Cin, Cout) -> (TH, W, Cout), f32 accumulation on the MXU.
        return lax.dot_general(
            a, w_ref[p, t],
            dimension_numbers=(((2,), (0,)), ((), ())),
            preferred_element_type=jnp.float32)

    s_pl, s_pc, s_pr = left(xp), xp, right(xp)
    s_cl, s_cc, s_cr = left(xc), xc, right(xc)
    s_nl, s_nc, s_nr = left(xn), xn, right(xn)

    bias = b_ref[...].astype(jnp.float32)             # (1, Cout), broadcasts

    out00 = tap(s_pl, 0, 0) + tap(s_pc, 0, 1) + tap(s_cl, 0, 2) + tap(s_cc, 0, 3) + bias
    out01 = tap(s_pc, 1, 0) + tap(s_pr, 1, 1) + tap(s_cc, 1, 2) + tap(s_cr, 1, 3) + bias
    out10 = tap(s_cl, 2, 0) + tap(s_cc, 2, 1) + tap(s_nl, 2, 2) + tap(s_nc, 2, 3) + bias
    out11 = tap(s_cc, 3, 0) + tap(s_cr, 3, 1) + tap(s_nc, 3, 2) + tap(s_nr, 3, 3) + bias

    # dw (even/odd output column) is packed on the lane axis: j = dw*Cout + c.
    o_ref[0, :, 0] = jnp.concatenate([out00, out01], axis=-1).astype(o_ref.dtype)
    o_ref[0, :, 1] = jnp.concatenate([out10, out11], axis=-1).astype(o_ref.dtype)


def _precombine_conv_weights(w_hwio):
    """(3,3,Cin,Cout) -> (4,4,Cin,Cout): per-(output-phase, tap) combined weights."""
    k = w_hwio.astype(jnp.float32)
    K = lambda a, b: k[a, b]
    taps = [
        # phase (dh=0, dw=0): sources [x[h-1,w-1], x[h-1,w], x[h,w-1], x[h,w]]
        [K(0, 0), K(0, 1) + K(0, 2), K(1, 0) + K(2, 0),
         K(1, 1) + K(1, 2) + K(2, 1) + K(2, 2)],
        # phase (0,1): [x[h-1,w], x[h-1,w+1], x[h,w], x[h,w+1]]
        [K(0, 0) + K(0, 1), K(0, 2),
         K(1, 0) + K(1, 1) + K(2, 0) + K(2, 1), K(1, 2) + K(2, 2)],
        # phase (1,0): [x[h,w-1], x[h,w], x[h+1,w-1], x[h+1,w]]
        [K(0, 0) + K(1, 0), K(0, 1) + K(0, 2) + K(1, 1) + K(1, 2),
         K(2, 0), K(2, 1) + K(2, 2)],
        # phase (1,1): [x[h,w], x[h,w+1], x[h+1,w], x[h+1,w+1]]
        [K(0, 0) + K(0, 1) + K(1, 0) + K(1, 1), K(0, 2) + K(1, 2),
         K(2, 0) + K(2, 1), K(2, 2)],
    ]
    return jnp.stack([jnp.stack(t, axis=0) for t in taps], axis=0)


def upsample2x_conv3x3(x_nhwc, w_hwio, b, *, block_h=None):
    N, H, W, Cin = x_nhwc.shape
    Cout = w_hwio.shape[-1]
    isz = x_nhwc.dtype.itemsize
    if block_h is None:
        # Target a few-MiB per-step working set (inputs + shifted temps + f32 phases
        # + double-buffered output) so the kernel also fits v7x's 64 MiB VMEM.
        budget = 8 * 1024 * 1024
        per_row = W * (11 * Cin * isz + (16 + 8 * isz) * Cout) + 1
        block_h = _largest_divisor_leq(H, max(1, budget // per_row))
    else:
        block_h = _largest_divisor_leq(H, block_h)
    n_h = H // block_h

    wc = _precombine_conv_weights(w_hwio).astype(x_nhwc.dtype)   # (4,4,Cin,Cout)
    b2 = b.reshape(1, Cout).astype(jnp.float32)

    # TODO(synk): single-buffer the (constant) weight block and add a Cout tile axis
    # for very large channel counts (>=512) to reduce weight VMEM pressure further.
    out5 = pl.pallas_call(
        _up2x_conv3x3_kernel,
        out_shape=jax.ShapeDtypeStruct((N, H, 2, W, 2 * Cout), x_nhwc.dtype),
        grid_spec=pltpu.PrefetchScalarGridSpec(
            num_scalar_prefetch=0,
            grid=(N, n_h),
            in_specs=[
                pl.BlockSpec((1, block_h, W, Cin), lambda n, i: (n, i, 0, 0)),
                pl.BlockSpec(
                    (1, 1, W, Cin),
                    lambda n, i: (n, jnp.maximum(i * block_h - 1, 0), 0, 0)),
                pl.BlockSpec(
                    (1, 1, W, Cin),
                    lambda n, i: (n, jnp.minimum(i * block_h + block_h, H - 1), 0, 0)),
                pl.BlockSpec((4, 4, Cin, Cout), lambda n, i: (0, 0, 0, 0)),
                pl.BlockSpec((1, Cout), lambda n, i: (0, 0)),
            ],
            out_specs=pl.BlockSpec((1, block_h, 2, W, 2 * Cout),
                                   lambda n, i: (n, i, 0, 0, 0)),
        ),
        compiler_params=pltpu.CompilerParams(
            dimension_semantics=("parallel", "parallel"),
            vmem_limit_bytes=48 * 1024 * 1024,
        ),
    )(x_nhwc, x_nhwc, x_nhwc, wc, b2)
    # Free (row-major) reshape: (N, H, 2, W, 2*Cout) -> (N, 2H, 2W, Cout).
    return out5.reshape(N, 2 * H, 2 * W, Cout)


# ----------------------------------------------------------------------------
# Pure nearest-neighbour 2x upsample (with_conv=False path).
# Pure data movement: row tile in, even/odd copies out via the same
# (N, H, 2, W, 2*C) output view -- no dup matrix, no iota, no MXU.
# ----------------------------------------------------------------------------
def _upsample2x_kernel(x_ref, o_ref):
    x = x_ref[0]                                  # (TH, W, C)
    d = jnp.concatenate([x, x], axis=-1)          # (TH, W, 2C): even/odd column copies
    o_ref[0, :, 0] = d
    o_ref[0, :, 1] = d


def nearest_upsample2x(x_nhwc, *, block_h=None):
    N, H, W, C = x_nhwc.shape
    isz = x_nhwc.dtype.itemsize
    if block_h is None:
        budget = 4 * 1024 * 1024
        per_row = 6 * W * C * isz + 1
        block_h = _largest_divisor_leq(H, max(1, budget // per_row))
    else:
        block_h = _largest_divisor_leq(H, block_h)
    n_h = H // block_h
    out5 = pl.pallas_call(
        _upsample2x_kernel,
        out_shape=jax.ShapeDtypeStruct((N, H, 2, W, 2 * C), x_nhwc.dtype),
        grid_spec=pltpu.PrefetchScalarGridSpec(
            num_scalar_prefetch=0,
            grid=(N, n_h),
            in_specs=[pl.BlockSpec((1, block_h, W, C), lambda n, i: (n, i, 0, 0))],
            out_specs=pl.BlockSpec((1, block_h, 2, W, 2 * C),
                                   lambda n, i: (n, i, 0, 0, 0)),
        ),
        compiler_params=pltpu.CompilerParams(
            dimension_semantics=("parallel", "parallel")),
    )(x_nhwc)
    return out5.reshape(N, 2 * H, 2 * W, C)


# ----------------------------------------------------------------------------
# Module wrapper (matches vqgan Upsample semantics; NCHW in, NCHW out).
# ----------------------------------------------------------------------------
class Upsample:
    def __init__(self, in_channels: int, with_conv: bool, key=None):
        self.with_conv = with_conv
        if self.with_conv:
            if key is None:
                key = jax.random.PRNGKey(42)
            kw_key, kb_key = jax.random.split(key)
            fan_in = in_channels * 3 * 3
            bound = 1.0 / (fan_in ** 0.5)
            # Deterministic synthetic init (PyTorch-style uniform); OIHW layout.
            self.w_oihw = jax.random.uniform(
                kw_key, (in_channels, in_channels, 3, 3), jnp.float32, -bound, bound)
            self.b = jax.random.uniform(
                kb_key, (in_channels,), jnp.float32, -bound, bound)
            # HWIO layout used by the NHWC Pallas kernel.
            self.w_hwio = jnp.transpose(self.w_oihw, (2, 3, 1, 0))

    def forward_nhwc(self, x_nhwc, *, block_h=None):
        if self.with_conv:
            return upsample2x_conv3x3(x_nhwc, self.w_hwio, self.b, block_h=block_h)
        return nearest_upsample2x(x_nhwc, block_h=block_h)

    def __call__(self, x_nchw, *, block_h=None):
        # TODO(synk): keep the surrounding model in NHWC (call forward_nhwc) to avoid
        # these two XLA layout transposes of the activation.
        x = jnp.transpose(x_nchw, (0, 2, 3, 1))      # NCHW -> NHWC (glue)
        y = self.forward_nhwc(x, block_h=block_h)    # fused Pallas kernel
        return jnp.transpose(y, (0, 3, 1, 2))        # NHWC -> NCHW (glue)


if __name__ == "__main__":
    key = jax.random.PRNGKey(0)
    kx, kp = jax.random.split(key)
    N, C, H, W = 2, 4, 16, 16
    x = jax.random.normal(kx, (N, C, H, W), jnp.float32)

    # pure-JAX reference pieces
    x_up = jnp.repeat(jnp.repeat(x, 2, axis=2), 2, axis=3)

    # with_conv=True branch (fused upsample+conv); block_h=4 exercises halo tiles.
    mod = Upsample(in_channels=C, with_conv=True, key=kp)
    out = jax.block_until_ready(mod(x, block_h=4))
    assert out.shape == (N, C, 2 * H, 2 * W), out.shape
    ref = lax.conv_general_dilated(
        x_up, mod.w_oihw, window_strides=(1, 1), padding=((1, 1), (1, 1)),
        dimension_numbers=("NCHW", "OIHW", "NCHW"))
    ref = ref + mod.b[None, :, None, None]
    err = float(jnp.max(jnp.abs(out - ref)))
    assert jnp.allclose(out, ref, atol=1e-4, rtol=1e-4), err

    # also run with the automatically chosen (single-tile) block size
    out_d = jax.block_until_ready(mod(x))
    err_d = float(jnp.max(jnp.abs(out_d - ref)))
    assert jnp.allclose(out_d, ref, atol=1e-4, rtol=1e-4), err_d

    # with_conv=False branch (pure nearest upsample kernel)
    mod2 = Upsample(in_channels=C, with_conv=False)
    out2 = jax.block_until_ready(mod2(x, block_h=4))
    assert out2.shape == (N, C, 2 * H, 2 * W)
    assert jnp.allclose(out2, x_up)

    print("KERNEL_OK")
</pallas_src>

<mosaic_0001>
module attributes {stable_mosaic.version = 11 : i64} {
  func.func @_up2x_conv3x3_kernel(%arg0: i32, %arg1: i32, %arg2: memref<1x4x16x4xf32, #tpu.memory_space<vmem>>, %arg3: memref<1x1x16x4xf32, #tpu.memory_space<vmem>>, %arg4: memref<1x1x16x4xf32, #tpu.memory_space<vmem>>, %arg5: memref<4x4x4x4xf32, #tpu.memory_space<vmem>>, %arg6: memref<1x4xf32, #tpu.memory_space<vmem>>, %arg7: memref<1x4x2x16x8xf32, #tpu.memory_space<vmem>>) attributes {dimension_semantics = [#tpu.dimension_semantics<parallel>, #tpu.dimension_semantics<parallel>], iteration_bounds = array<i64: 2, 4>, scalar_prefetch = 0 : i64, scratch_operands = 0 : i64, tpu.core_type = #tpu.core_type<tc>, window_params = [{transform_indices = @transform_0, window_bounds = array<i64: 1, 4, 16, 4>}, {transform_indices = @transform_1, window_bounds = array<i64: 1, 1, 16, 4>}, {transform_indices = @transform_2, window_bounds = array<i64: 1, 1, 16, 4>}, {pipeline_mode = #tpu.pipeline_mode<synchronous>, transform_indices = @transform_3, window_bounds = array<i64: 4, 4, 4, 4>}, {pipeline_mode = #tpu.pipeline_mode<synchronous>, transform_indices = @transform_4, window_bounds = array<i64: 1, 4>}, {transform_indices = @transform_5, window_bounds = array<i64: 1, 4, 2, 16, 8>}]} {
    %c0 = arith.constant 0 : index
    %c0_0 = arith.constant 0 : index
    %c0_1 = arith.constant 0 : index
    %c0_2 = arith.constant 0 : index
    %0 = vector.load %arg2[%c0, %c0_0, %c0_1, %c0_2] : memref<1x4x16x4xf32, #tpu.memory_space<vmem>>, vector<1x4x16x4xf32>
    %1 = vector.shape_cast %0 : vector<1x4x16x4xf32> to vector<4x16x4xf32>
    %c0_i32 = arith.constant 0 : i32
    %2 = arith.cmpi sgt, %arg1, %c0_i32 : i32
    %3 = arith.extui %2 : i1 to i32
    %4 = arith.sitofp %3 : i32 to f32
    %c3_i32 = arith.constant 3 : i32
    %5 = arith.cmpi slt, %arg1, %c3_i32 : i32
    %6 = arith.extui %5 : i1 to i32
    %7 = arith.sitofp %6 : i32 to f32
    %c0_3 = arith.constant 0 : index
    %c0_4 = arith.constant 0 : index
    %c0_5 = arith.constant 0 : index
    %c0_6 = arith.constant 0 : index
    %8 = vector.load %arg3[%c0_3, %c0_4, %c0_5, %c0_6] : memref<1x1x16x4xf32, #tpu.memory_space<vmem>>, vector<1x1x16x4xf32>
    %9 = vector.shape_cast %8 : vector<1x1x16x4xf32> to vector<1x16x4xf32>
    %10 = vector.broadcast %4 : f32 to vector<1x16x4xf32>
    %11 = arith.mulf %9, %10 : vector<1x16x4xf32>
    %c0_7 = arith.constant 0 : index
    %c0_8 = arith.constant 0 : index
    %c0_9 = arith.constant 0 : index
    %c0_10 = arith.constant 0 : index
    %12 = vector.load %arg4[%c0_7, %c0_8, %c0_9, %c0_10] : memref<1x1x16x4xf32, #tpu.memory_space<vmem>>, vector<1x1x16x4xf32>
    %13 = vector.shape_cast %12 : vector<1x1x16x4xf32> to vector<1x16x4xf32>
    %14 = vector.broadcast %7 : f32 to vector<1x16x4xf32>
    %15 = arith.mulf %13, %14 : vector<1x16x4xf32>
    %16 = vector.extract_strided_slice %1 {offsets = [0, 0, 0], sizes = [3, 16, 4], strides = [1, 1, 1]} : vector<4x16x4xf32> to vector<3x16x4xf32>
    %17 = tpu.concatenate %11, %16 in 0 : vector<1x16x4xf32>, vector<3x16x4xf32> -> vector<4x16x4xf32>
    %18 = vector.extract_strided_slice %1 {offsets = [1, 0, 0], sizes = [3, 16, 4], strides = [1, 1, 1]} : vector<4x16x4xf32> to vector<3x16x4xf32>
    %19 = tpu.concatenate %18, %15 in 0 : vector<3x16x4xf32>, vector<1x16x4xf32> -> vector<4x16x4xf32>
    %20 = tpu.iota {dimensions = array<i32: 1>} : vector<1x16x1xi32>
    %c0_i32_11 = arith.constant 0 : i32
    %21 = vector.broadcast %c0_i32_11 : i32 to vector<1x16x1xi32>
    %22 = arith.cmpi eq, %20, %21 : vector<1x16x1xi32>
    %c15_i32 = arith.constant 15 : i32
    %23 = vector.broadcast %c15_i32 : i32 to vector<1x16x1xi32>
    %24 = arith.cmpi eq, %20, %23 : vector<1x16x1xi32>
    %c1_i32 = arith.constant 1 : i32
    %25 = tpu.dynamic_rotate %17 by %c1_i32 dim 1 : vector<4x16x4xf32>, i32 -> vector<4x16x4xf32>
    %cst = arith.constant 0.000000e+00 : f32
    %26 = vector.shape_cast %22 : vector<1x16x1xi1> to vector<1x16x1xi1>
    %27 = vector.broadcast %26 : vector<1x16x1xi1> to vector<4x16x4xi1>
    %28 = vector.broadcast %cst : f32 to vector<4x16x4xf32>
    %29 = arith.select %27, %28, %25 : vector<4x16x4xi1>, vector<4x16x4xf32>
    %c15_i32_12 = arith.constant 15 : i32
    %30 = tpu.dynamic_rotate %17 by %c15_i32_12 dim 1 : vector<4x16x4xf32>, i32 -> vector<4x16x4xf32>
    %cst_13 = arith.constant 0.000000e+00 : f32
    %31 = vector.shape_cast %24 : vector<1x16x1xi1> to vector<1x16x1xi1>
    %32 = vector.broadcast %31 : vector<1x16x1xi1> to vector<4x16x4xi1>
    %33 = vector.broadcast %cst_13 : f32 to vector<4x16x4xf32>
    %34 = arith.select %32, %33, %30 : vector<4x16x4xi1>, vector<4x16x4xf32>
    %c1_i32_14 = arith.constant 1 : i32
    %35 = tpu.dynamic_rotate %1 by %c1_i32_14 dim 1 : vector<4x16x4xf32>, i32 -> vector<4x16x4xf32>
    %cst_15 = arith.constant 0.000000e+00 : f32
    %36 = vector.shape_cast %22 : vector<1x16x1xi1> to vector<1x16x1xi1>
    %37 = vector.broadcast %36 : vector<1x16x1xi1> to vector<4x16x4xi1>
    %38 = vector.broadcast %cst_15 : f32 to vector<4x16x4xf32>
    %39 = arith.select %37, %38, %35 : vector<4x16x4xi1>, vector<4x16x4xf32>
    %c15_i32_16 = arith.constant 15 : i32
    %40 = tpu.dynamic_rotate %1 by %c15_i32_16 dim 1 : vector<4x16x4xf32>, i32 -> vector<4x16x4xf32>
    %cst_17 = arith.constant 0.000000e+00 : f32
    %41 = vector.shape_cast %24 : vector<1x16x1xi1> to vector<1x16x1xi1>
    %42 = vector.broadcast %41 : vector<1x16x1xi1> to vector<4x16x4xi1>
    %43 = vector.broadcast %cst_17 : f32 to vector<4x16x4xf32>
    %44 = arith.select %42, %43, %40 : vector<4x16x4xi1>, vector<4x16x4xf32>
    %c1_i32_18 = arith.constant 1 : i32
    %45 = tpu.dynamic_rotate %19 by %c1_i32_18 dim 1 : vector<4x16x4xf32>, i32 -> vector<4x16x4xf32>
    %cst_19 = arith.constant 0.000000e+00 : f32
    %46 = vector.shape_cast %22 : vector<1x16x1xi1> to vector<1x16x1xi1>
    %47 = vector.broadcast %46 : vector<1x16x1xi1> to vector<4x16x4xi1>
    %48 = vector.broadcast %cst_19 : f32 to vector<4x16x4xf32>
    %49 = arith.select %47, %48, %45 : vector<4x16x4xi1>, vector<4x16x4xf32>
    %c15_i32_20 = arith.constant 15 : i32
    %50 = tpu.dynamic_rotate %19 by %c15_i32_20 dim 1 : vector<4x16x4xf32>, i32 -> vector<4x16x4xf32>
    %cst_21 = arith.constant 0.000000e+00 : f32
    %51 = vector.shape_cast %24 : vector<1x16x1xi1> to vector<1x16x1xi1>
    %52 = vector.broadcast %51 : vector<1x16x1xi1> to vector<4x16x4xi1>
    %53 = vector.broadcast %cst_21 : f32 to vector<4x16x4xf32>
    %54 = arith.select %52, %53, %50 : vector<4x16x4xi1>, vector<4x16x4xf32>
    %c0_22 = arith.constant 0 : index
    %c0_23 = arith.constant 0 : index
    %55 = vector.load %arg6[%c0_22, %c0_23] : memref<1x4xf32, #tpu.memory_space<vmem>>, vector<1x4xf32>
    %c0_24 = arith.constant 0 : index
    %c0_25 = arith.constant 0 : index
    %c0_26 = arith.constant 0 : index
    %c0_27 = arith.constant 0 : index
    %56 = vector.load %arg5[%c0_24, %c0_25, %c0_26, %c0_27] : memref<4x4x4x4xf32, #tpu.memory_space<vmem>>, vector<1x1x4x4xf32>
    %57 = vector.shape_cast %56 : vector<1x1x4x4xf32> to vector<4x4xf32>
    %cst_28 = arith.constant dense<0.000000e+00> : vector<4x16x4xf32>
    %58 = tpu.matmul %29, %57, %cst_28 {dimension_numbers = #tpu.dot_dimension_numbers<[2], [0], [0, 1], [1], [0, 0, 0, 1, 1, 1], [], []>} : vector<4x16x4xf32>, vector<4x4xf32>, vector<4x16x4xf32> -> vector<4x16x4xf32>
    %c0_29 = arith.constant 0 : index
    %c1 = arith.constant 1 : index
    %c0_30 = arith.constant 0 : index
    %c0_31 = arith.constant 0 : index
    %59 = vector.load %arg5[%c0_29, %c1, %c0_30, %c0_31] : memref<4x4x4x4xf32, #tpu.memory_space<vmem>>, vector<1x1x4x4xf32>
    %60 = vector.shape_cast %59 : vector<1x1x4x4xf32> to vector<4x4xf32>
    %cst_32 = arith.constant dense<0.000000e+00> : vector<4x16x4xf32>
    %61 = tpu.matmul %17, %60, %cst_32 {dimension_numbers = #tpu.dot_dimension_numbers<[2], [0], [0, 1], [1], [0, 0, 0, 1, 1, 1], [], []>} : vector<4x16x4xf32>, vector<4x4xf32>, vector<4x16x4xf32> -> vector<4x16x4xf32>
    %62 = arith.addf %58, %61 : vector<4x16x4xf32>
    %c0_33 = arith.constant 0 : index
    %c2 = arith.constant 2 : index
    %c0_34 = arith.constant 0 : index
    %c0_35 = arith.constant 0 : index
    %63 = vector.load %arg5[%c0_33, %c2, %c0_34, %c0_35] : memref<4x4x4x4xf32, #tpu.memory_space<vmem>>, vector<1x1x4x4xf32>
    %64 = vector.shape_cast %63 : vector<1x1x4x4xf32> to vector<4x4xf32>
    %cst_36 = arith.constant dense<0.000000e+00> : vector<4x16x4xf32>
    %65 = tpu.matmul %39, %64, %cst_36 {dimension_numbers = #tpu.dot_dimension_numbers<[2], [0], [0, 1], [1], [0, 0, 0, 1, 1, 1], [], []>} : vector<4x16x4xf32>, vector<4x4xf32>, vector<4x16x4xf32> -> vector<4x16x4xf32>
    %66 = arith.addf %62, %65 : vector<4x16x4xf32>
    %c0_37 = arith.constant 0 : index
    %c3 = arith.constant 3 : index
    %c0_38 = arith.constant 0 : index
    %c0_39 = arith.constant 0 : index
    %67 = vector.load %arg5[%c0_37, %c3, %c0_38, %c0_39] : memref<4x4x4x4xf32, #tpu.memory_space<vmem>>, vector<1x1x4x4xf32>
    %68 = vector.shape_cast %67 : vector<1x1x4x4xf32> to vector<4x4xf32>
    %cst_40 = arith.constant dense<0.000000e+00> : vector<4x16x4xf32>
    %69 = tpu.matmul %1, %68, %cst_40 {dimension_numbers = #tpu.dot_dimension_numbers<[2], [0], [0, 1], [1], [0, 0, 0, 1, 1, 1], [], []>} : vector<4x16x4xf32>, vector<4x4xf32>, vector<4x16x4xf32> -> vector<4x16x4xf32>
    %70 = arith.addf %66, %69 : vector<4x16x4xf32>
    %71 = vector.shape_cast %55 : vector<1x4xf32> to vector<1x1x4xf32>
    %72 = vector.broadcast %71 : vector<1x1x4xf32> to vector<4x16x4xf32>
    %73 = arith.addf %70, %72 : vector<4x16x4xf32>
    %c1_41 = arith.constant 1 : index
    %c0_42 = arith.constant 0 : index
    %c0_43 = arith.constant 0 : index
    %c0_44 = arith.constant 0 : index
    %74 = vector.load %arg5[%c1_41, %c0_42, %c0_43, %c0_44] : memref<4x4x4x4xf32, #tpu.memory_space<vmem>>, vector<1x1x4x4xf32>
    %75 = vector.shape_cast %74 : vector<1x1x4x4xf32> to vector<4x4xf32>
    %cst_45 = arith.constant dense<0.000000e+00> : vector<4x16x4xf32>
    %76 = tpu.matmul %17, %75, %cst_45 {dimension_numbers = #tpu.dot_dimension_numbers<[2], [0], [0, 1], [1], [0, 0, 0, 1, 1, 1], [], []>} : vector<4x16x4xf32>, vector<4x4xf32>, vector<4x16x4xf32> -> vector<4x16x4xf32>
    %c1_46 = arith.constant 1 : index
    %c1_47 = arith.constant 1 : index
    %c0_48 = arith.constant 0 : index
    %c0_49 = arith.constant 0 : index
    %77 = vector.load %arg5[%c1_46, %c1_47, %c0_48, %c0_49] : memref<4x4x4x4xf32, #tpu.memory_space<vmem>>, vector<1x1x4x4xf32>
    %78 = vector.shape_cast %77 : vector<1x1x4x4xf32> to vector<4x4xf32>
    %cst_50 = arith.constant dense<0.000000e+00> : vector<4x16x4xf32>
    %79 = tpu.matmul %34, %78, %cst_50 {dimension_numbers = #tpu.dot_dimension_numbers<[2], [0], [0, 1], [1], [0, 0, 0, 1, 1, 1], [], []>} : vector<4x16x4xf32>, vector<4x4xf32>, vector<4x16x4xf32> -> vector<4x16x4xf32>
    %80 = arith.addf %76, %79 : vector<4x16x4xf32>
    %c1_51 = arith.constant 1 : index
    %c2_52 = arith.constant 2 : index
    %c0_53 = arith.constant 0 : index
    %c0_54 = arith.constant 0 : index
    %81 = vector.load %arg5[%c1_51, %c2_52, %c0_53, %c0_54] : memref<4x4x4x4xf32, #tpu.memory_space<vmem>>, vector<1x1x4x4xf32>
    %82 = vector.shape_cast %81 : vector<1x1x4x4xf32> to vector<4x4xf32>
    %cst_55 = arith.constant dense<0.000000e+00> : vector<4x16x4xf32>
    %83 = tpu.matmul %1, %82, %cst_55 {dimension_numbers = #tpu.dot_dimension_numbers<[2], [0], [0, 1], [1], [0, 0, 0, 1, 1, 1], [], []>} : vector<4x16x4xf32>, vector<4x4xf32>, vector<4x16x4xf32> -> vector<4x16x4xf32>
    %84 = arith.addf %80, %83 : vector<4x16x4xf32>
    %c1_56 = arith.constant 1 : index
    %c3_57 = arith.constant 3 : index
    %c0_58 = arith.constant 0 : index
    %c0_59 = arith.constant 0 : index
    %85 = vector.load %arg5[%c1_56, %c3_57, %c0_58, %c0_59] : memref<4x4x4x4xf32, #tpu.memory_space<vmem>>, vector<1x1x4x4xf32>
    %86 = vector.shape_cast %85 : vector<1x1x4x4xf32> to vector<4x4xf32>
    %cst_60 = arith.constant dense<0.000000e+00> : vector<4x16x4xf32>
    %87 = tpu.matmul %44, %86, %cst_60 {dimension_numbers = #tpu.dot_dimension_numbers<[2], [0], [0, 1], [1], [0, 0, 0, 1, 1, 1], [], []>} : vector<4x16x4xf32>, vector<4x4xf32>, vector<4x16x4xf32> -> vector<4x16x4xf32>
    %88 = arith.addf %84, %87 : vector<4x16x4xf32>
    %89 = vector.shape_cast %55 : vector<1x4xf32> to vector<1x1x4xf32>
    %90 = vector.broadcast %89 : vector<1x1x4xf32> to vector<4x16x4xf32>
    %91 = arith.addf %88, %90 : vector<4x16x4xf32>
    %c2_61 = arith.constant 2 : index
    %c0_62 = arith.constant 0 : index
    %c0_63 = arith.constant 0 : index
    %c0_64 = arith.constant 0 : index
    %92 = vector.load %arg5[%c2_61, %c0_62, %c0_63, %c0_64] : memref<4x4x4x4xf32, #tpu.memory_space<vmem>>, vector<1x1x4x4xf32>
    %93 = vector.shape_cast %92 : vector<1x1x4x4xf32> to vector<4x4xf32>
    %cst_65 = arith.constant dense<0.000000e+00> : vector<4x16x4xf32>
    %94 = tpu.matmul %39, %93, %cst_65 {dimension_numbers = #tpu.dot_dimension_numbers<[2], [0], [0, 1], [1], [0, 0, 0, 1, 1, 1], [], []>} : vector<4x16x4xf32>, vector<4x4xf32>, vector<4x16x4xf32> -> vector<4x16x4xf32>
    %c2_66 = arith.constant 2 : index
    %c1_67 = arith.constant 1 : index
    %c0_68 = arith.constant 0 : index
    %c0_69 = arith.constant 0 : index
    %95 = vector.load %arg5[%c2_66, %c1_67, %c0_68, %c0_69] : memref<4x4x4x4xf32, #tpu.memory_space<vmem>>, vector<1x1x4x4xf32>
    %96 = vector.shape_cast %95 : vector<1x1x4x4xf32> to vector<4x4xf32>
    %cst_70 = arith.constant dense<0.000000e+00> : vector<4x16x4xf32>
    %97 = tpu.matmul %1, %96, %cst_70 {dimension_numbers = #tpu.dot_dimension_numbers<[2], [0], [0, 1], [1], [0, 0, 0, 1, 1, 1], [], []>} : vector<4x16x4xf32>, vector<4x4xf32>, vector<4x16x4xf32> -> vector<4x16x4xf32>
    %98 = arith.addf %94, %97 : vector<4x16x4xf32>
    %c2_71 = arith.constant 2 : index
    %c2_72 = arith.constant 2 : index
    %c0_73 = arith.constant 0 : index
    %c0_74 = arith.constant 0 : index
    %99 = vector.load %arg5[%c2_71, %c2_72, %c0_73, %c0_74] : memref<4x4x4x4xf32, #tpu.memory_space<vmem>>, vector<1x1x4x4xf32>
    %100 = vector.shape_cast %99 : vector<1x1x4x4xf32> to vector<4x4xf32>
    %cst_75 = arith.constant dense<0.000000e+00> : vector<4x16x4xf32>
    %101 = tpu.matmul %49, %100, %cst_75 {dimension_numbers = #tpu.dot_dimension_numbers<[2], [0], [0, 1], [1], [0, 0, 0, 1, 1, 1], [], []>} : vector<4x16x4xf32>, vector<4x4xf32>, vector<4x16x4xf32> -> vector<4x16x4xf32>
    %102 = arith.addf %98, %101 : vector<4x16x4xf32>
    %c2_76 = arith.constant 2 : index
    %c3_77 = arith.constant 3 : index
    %c0_78 = arith.constant 0 : index
    %c0_79 = arith.constant 0 : index
    %103 = vector.load %arg5[%c2_76, %c3_77, %c0_78, %c0_79] : memref<4x4x4x4xf32, #tpu.memory_space<vmem>>, vector<1x1x4x4xf32>
    %104 = vector.shape_cast %103 : vector<1x1x4x4xf32> to vector<4x4xf32>
    %cst_80 = arith.constant dense<0.000000e+00> : vector<4x16x4xf32>
    %105 = tpu.matmul %19, %104, %cst_80 {dimension_numbers = #tpu.dot_dimension_numbers<[2], [0], [0, 1], [1], [0, 0, 0, 1, 1, 1], [], []>} : vector<4x16x4xf32>, vector<4x4xf32>, vector<4x16x4xf32> -> vector<4x16x4xf32>
    %106 = arith.addf %102, %105 : vector<4x16x4xf32>
    %107 = vector.shape_cast %55 : vector<1x4xf32> to vector<1x1x4xf32>
    %108 = vector.broadcast %107 : vector<1x1x4xf32> to vector<4x16x4xf32>
    %109 = arith.addf %106, %108 : vector<4x16x4xf32>
    %c3_81 = arith.constant 3 : index
    %c0_82 = arith.constant 0 : index
    %c0_83 = arith.constant 0 : index
    %c0_84 = arith.constant 0 : index
    %110 = vector.load %arg5[%c3_81, %c0_82, %c0_83, %c0_84] : memref<4x4x4x4xf32, #tpu.memory_space<vmem>>, vector<1x1x4x4xf32>
    %111 = vector.shape_cast %110 : vector<1x1x4x4xf32> to vector<4x4xf32>
    %cst_85 = arith.constant dense<0.000000e+00> : vector<4x16x4xf32>
    %112 = tpu.matmul %1, %111, %cst_85 {dimension_numbers = #tpu.dot_dimension_numbers<[2], [0], [0, 1], [1], [0, 0, 0, 1, 1, 1], [], []>} : vector<4x16x4xf32>, vector<4x4xf32>, vector<4x16x4xf32> -> vector<4x16x4xf32>
    %c3_86 = arith.constant 3 : index
    %c1_87 = arith.constant 1 : index
    %c0_88 = arith.constant 0 : index
    %c0_89 = arith.constant 0 : index
    %113 = vector.load %arg5[%c3_86, %c1_87, %c0_88, %c0_89] : memref<4x4x4x4xf32, #tpu.memory_space<vmem>>, vector<1x1x4x4xf32>
    %114 = vector.shape_cast %113 : vector<1x1x4x4xf32> to vector<4x4xf32>
    %cst_90 = arith.constant dense<0.000000e+00> : vector<4x16x4xf32>
    %115 = tpu.matmul %44, %114, %cst_90 {dimension_numbers = #tpu.dot_dimension_numbers<[2], [0], [0, 1], [1], [0, 0, 0, 1, 1, 1], [], []>} : vector<4x16x4xf32>, vector<4x4xf32>, vector<4x16x4xf32> -> vector<4x16x4xf32>
    %116 = arith.addf %112, %115 : vector<4x16x4xf32>
    %c3_91 = arith.constant 3 : index
    %c2_92 = arith.constant 2 : index
    %c0_93 = arith.constant 0 : index
    %c0_94 = arith.constant 0 : index
    %117 = vector.load %arg5[%c3_91, %c2_92, %c0_93, %c0_94] : memref<4x4x4x4xf32, #tpu.memory_space<vmem>>, vector<1x1x4x4xf32>
    %118 = vector.shape_cast %117 : vector<1x1x4x4xf32> to vector<4x4xf32>
    %cst_95 = arith.constant dense<0.000000e+00> : vector<4x16x4xf32>
    %119 = tpu.matmul %19, %118, %cst_95 {dimension_numbers = #tpu.dot_dimension_numbers<[2], [0], [0, 1], [1], [0, 0, 0, 1, 1, 1], [], []>} : vector<4x16x4xf32>, vector<4x4xf32>, vector<4x16x4xf32> -> vector<4x16x4xf32>
    %120 = arith.addf %116, %119 : vector<4x16x4xf32>
    %c3_96 = arith.constant 3 : index
    %c3_97 = arith.constant 3 : index
    %c0_98 = arith.constant 0 : index
    %c0_99 = arith.constant 0 : index
    %121 = vector.load %arg5[%c3_96, %c3_97, %c0_98, %c0_99] : memref<4x4x4x4xf32, #tpu.memory_space<vmem>>, vector<1x1x4x4xf32>
    %122 = vector.shape_cast %121 : vector<1x1x4x4xf32> to vector<4x4xf32>
    %cst_100 = arith.constant dense<0.000000e+00> : vector<4x16x4xf32>
    %123 = tpu.matmul %54, %122, %cst_100 {dimension_numbers = #tpu.dot_dimension_numbers<[2], [0], [0, 1], [1], [0, 0, 0, 1, 1, 1], [], []>} : vector<4x16x4xf32>, vector<4x4xf32>, vector<4x16x4xf32> -> vector<4x16x4xf32>
    %124 = arith.addf %120, %123 : vector<4x16x4xf32>
    %125 = vector.shape_cast %55 : vector<1x4xf32> to vector<1x1x4xf32>
    %126 = vector.broadcast %125 : vector<1x1x4xf32> to vector<4x16x4xf32>
    %127 = arith.addf %124, %126 : vector<4x16x4xf32>
    %128 = tpu.concatenate %73, %91 in 2 : vector<4x16x4xf32>, vector<4x16x4xf32> -> vector<4x16x8xf32>
    %c0_101 = arith.constant 0 : index
    %c0_102 = arith.constant 0 : index
    %c0_103 = arith.constant 0 : index
    %c0_104 = arith.constant 0 : index
    %c0_105 = arith.constant 0 : index
    %129 = vector.load %arg7[%c0_101, %c0_102, %c0_103, %c0_104, %c0_105] : memref<1x4x2x16x8xf32, #tpu.memory_space<vmem>>, vector<1x4x1x16x8xf32>
    %130 = vector.shape_cast %129 : vector<1x4x1x16x8xf32> to vector<4x16x8xf32>
    %131 = vector.shape_cast %128 : vector<4x16x8xf32> to vector<1x4x1x16x8xf32>
    tpu.vector_store %arg7[%c0_101, %c0_102, %c0_103, %c0_104, %c0_105], %131 {strides = array<i32>} : memref<1x4x2x16x8xf32, #tpu.memory_space<vmem>>, vector<1x4x1x16x8xf32>,
    %132 = tpu.concatenate %109, %127 in 2 : vector<4x16x4xf32>, vector<4x16x4xf32> -> vector<4x16x8xf32>
    %c0_106 = arith.constant 0 : index
    %c0_107 = arith.constant 0 : index
    %c1_108 = arith.constant 1 : index
    %c0_109 = arith.constant 0 : index
    %c0_110 = arith.constant 0 : index
    %133 = vector.load %arg7[%c0_106, %c0_107, %c1_108, %c0_109, %c0_110] : memref<1x4x2x16x8xf32, #tpu.memory_space<vmem>>, vector<1x4x1x16x8xf32>
    %134 = vector.shape_cast %133 : vector<1x4x1x16x8xf32> to vector<4x16x8xf32>
    %135 = vector.shape_cast %132 : vector<4x16x8xf32> to vector<1x4x1x16x8xf32>
    tpu.vector_store %arg7[%c0_106, %c0_107, %c1_108, %c0_109, %c0_110], %135 {strides = array<i32>} : memref<1x4x2x16x8xf32, #tpu.memory_space<vmem>>, vector<1x4x1x16x8xf32>,
    return
  }
  func.func @transform_0(%arg0: i32, %arg1: i32) -> (i32, i32, i32, i32) {
    %c0_i32 = arith.constant 0 : i32
    %c0_i32_0 = arith.constant 0 : i32
    %c0_i32_1 = arith.constant 0 : i32
    return %arg0, %arg1, %c0_i32, %c0_i32_0 : i32, i32, i32, i32
  }
  func.func @transform_1(%arg0: i32, %arg1: i32) -> (i32, i32, i32, i32) {
    %c4_i32 = arith.constant 4 : i32
    %0 = arith.muli %arg1, %c4_i32 : i32
    %c1_i32 = arith.constant 1 : i32
    %1 = arith.subi %0, %c1_i32 : i32
    %c0_i32 = arith.constant 0 : i32
    %2 = arith.maxsi %1, %c0_i32 : i32
    %c0_i32_0 = arith.constant 0 : i32
    %c0_i32_1 = arith.constant 0 : i32
    %c0_i32_2 = arith.constant 0 : i32
    return %arg0, %2, %c0_i32_0, %c0_i32_1 : i32, i32, i32, i32
  }
  func.func @transform_2(%arg0: i32, %arg1: i32) -> (i32, i32, i32, i32) {
    %c4_i32 = arith.constant 4 : i32
    %0 = arith.muli %arg1, %c4_i32 : i32
    %c4_i32_0 = arith.constant 4 : i32
    %1 = arith.addi %0, %c4_i32_0 : i32
    %c15_i32 = arith.constant 15 : i32
    %2 = arith.minsi %1, %c15_i32 : i32
    %c0_i32 = arith.constant 0 : i32
    %c0_i32_1 = arith.constant 0 : i32
    %c0_i32_2 = arith.constant 0 : i32
    return %arg0, %2, %c0_i32, %c0_i32_1 : i32, i32, i32, i32
  }
  func.func @transform_3(%arg0: i32, %arg1: i32) -> (i32, i32, i32, i32) {
    %c0_i32 = arith.constant 0 : i32
    %c0_i32_0 = arith.constant 0 : i32
    %c0_i32_1 = arith.constant 0 : i32
    %c0_i32_2 = arith.constant 0 : i32
    %c0_i32_3 = arith.constant 0 : i32
    return %c0_i32, %c0_i32_0, %c0_i32_1, %c0_i32_2 : i32, i32, i32, i32
  }
  func.func @transform_4(%arg0: i32, %arg1: i32) -> (i32, i32) {
    %c0_i32 = arith.constant 0 : i32
    %c0_i32_0 = arith.constant 0 : i32
    %c0_i32_1 = arith.constant 0 : i32
    return %c0_i32, %c0_i32_0 : i32, i32
  }
  func.func @transform_5(%arg0: i32, %arg1: i32) -> (i32, i32, i32, i32, i32) {
    %c0_i32 = arith.constant 0 : i32
    %c0_i32_0 = arith.constant 0 : i32
    %c0_i32_1 = arith.constant 0 : i32
    %c0_i32_2 = arith.constant 0 : i32
    return %arg0, %arg1, %c0_i32, %c0_i32_0, %c0_i32_1 : i32, i32, i32, i32, i32
  }
}

</mosaic_0001>

<llo_original>
// kernel: tpu_custom_call.1
$region0: #{tpu_custom_call.1}
  #allocation0 [shape = 'u32[]', space=smem, size = 0x4, offset = 0x4, fixed_abs, tag = 'smem constant byte address 0x4 - core index']
  #allocation1 [shape = 'u32[144,128]{1,0:T(1,128)}', space=vmem, size = 0x12000, scoped, tag = 'internal scratch']
  %s0 = inlined_call_operand.vmem [shape: f32[2,16,16,4], index: 0, kind: input, shape index: {}]
  %s1 = inlined_call_operand.vmem [shape: f32[2,16,16,4], index: 1, kind: input, shape index: {}]
  %s2 = inlined_call_operand.vmem [shape: f32[2,16,16,4], index: 2, kind: input, shape index: {}]
  %s3 = inlined_call_operand.vmem [shape: f32[4,4,4,4], index: 3, kind: input, shape index: {}]
  %s4 = inlined_call_operand.vmem [shape: f32[1,4], index: 4, kind: input, shape index: {}]
  %s5 = inlined_call_operand.vmem [shape: f32[2,16,2,16,8], index: 5, kind: output, shape index: {}]
  %s6 = sld [smem:[#allocation0]]
  $region53: #{tpu_custom_call.1} parent=0
    _
  %s8 = ssub.s32 1, %s6
  %s9 = scalar_select 0, %s8, %s6
  loop: start=0, step=1, limit=10
  $region2: #{tpu_custom_call.1} parent=0 // loop_pre_header
    _
  $region3: #{tpu_custom_call.1} parent=0 // loop_header
    %s11 = sphi 0, %s15
    %p12 = scmp.ge.s32.totalorder %s11, 10
    %s18 = sphi 0, %s30
    %s19 = sphi 0, %s26
    %s20 = sphi 0, %s18
    %s21 = sphi 0, %s19
    %s22 = sphi 0, %s20
    %s23 = sphi 0, %s21
    %s35 = sphi 0, %s37
    %s38 = sphi 0, %s35
    %s39 = sphi 0, %s38
    %s55 = sphi 0, %s39
    %s71 = sphi 0, %s73
    %s74 = sphi 0, %s71
    %s75 = sphi 0, %s74
    %s91 = sphi 0, %s75
    %s107 = sphi 0, %s109
    %s110 = sphi 0, %s107
    %s111 = sphi 0, %s110
    %s127 = sphi 0, %s111
    %s131 = sphi 0, %s131
    %s133 = sphi 0, %s131
    %s134 = sphi 0, %s133
    %s148 = sphi 0, %s134
    %s152 = sphi 0, %s152
    %s154 = sphi 0, %s152
    %s155 = sphi 0, %s154
    %s169 = sphi 0, %s155
    %s177 = sphi 0, %s179
    %s180 = sphi 0, %s177
    %s181 = sphi 0, %s180
    %s197 = sphi 0, %s181
  $region4: #{tpu_custom_call.1} parent=0 // loop_header_branch
    %14 = sbr.rel (%p12) target = $region8
  $region5: #{tpu_custom_call.1} parent=0 // loop_body
    %s16 = ssub.s32 %s11, 1
    %s17 = ssub.s32 %s11, 2
    %s24 = sadd.s32 1, %s19
    %p25 = scmp.ge.s32.totalorder %s24, 4
    %s26 = scalar_select %p25, 0, %s24
    %s27 = sadd.s32 1, %s18
    %s28 = scalar_select %p25, %s27, %s18
    %p29 = scmp.ge.s32.totalorder %s28, 2
    %s30 = scalar_select %p29, 0, %s28
    %s31 = ssub.s32 %s18, %s30
    %s32 = ssub.s32 %s19, %s26
    %s33 = sor.u32 %s31, %s32
    %p34 = scmp.eq.s32.totalorder %s33, 0
    %s36 = sadd.s32 %s35, 1
    %s37 = scalar_select %p34, %s35, %s36
    %p40 = pneg %p34
    %p41 = scmp.eq.s32.totalorder %s11, 7
    %p42 = por %p40, %p41
    %p43 = scmp.ne.s32.totalorder %s35, %s38
    %p44 = scmp.eq.s32.totalorder %s11, 0
    %p45 = por %p43, %p44
    %p46 = scmp.ne.s32.totalorder %s35, %s38
    %p47 = scmp.eq.s32.totalorder %s16, 7
    %p48 = por %p46, %p47
    %p49 = scmp.ne.s32.totalorder %s38, %s39
    %p50 = scmp.eq.s32.totalorder %s16, 0
    %p51 = por %p49, %p50
    %p52 = scmp.ne.s32.totalorder %s38, %s39
    %p53 = scmp.eq.s32.totalorder %s17, 7
    %p54 = por %p52, %p53
    %p56 = scmp.ne.s32.totalorder %s39, %s55
    %p57 = scmp.eq.s32.totalorder %s17, 0
    %p58 = por %p56, %p57
    %s59 = smul.u32 %s19, 4
    %s60 = ssub.s32 %s59, 1
    %p61 = scmp.gt.s32.totalorder %s60, 0
    %s62 = scalar_select %p61, %s60, 0
    %s63 = smul.u32 %s26, 4
    %s64 = ssub.s32 %s63, 1
    %p65 = scmp.gt.s32.totalorder %s64, 0
    %s66 = scalar_select %p65, %s64, 0
    %s67 = ssub.s32 %s18, %s30
    %s68 = ssub.s32 %s62, %s66
    %s69 = sor.u32 %s67, %s68
    %p70 = scmp.eq.s32.totalorder %s69, 0
    %s72 = sadd.s32 %s71, 1
    %s73 = scalar_select %p70, %s71, %s72
    %p76 = pneg %p70
    %p77 = scmp.eq.s32.totalorder %s11, 7
    %p78 = por %p76, %p77
    %p79 = scmp.ne.s32.totalorder %s71, %s74
    %p80 = scmp.eq.s32.totalorder %s11, 0
    %p81 = por %p79, %p80
    %p82 = scmp.ne.s32.totalorder %s71, %s74
    %p83 = scmp.eq.s32.totalorder %s16, 7
    %p84 = por %p82, %p83
    %p85 = scmp.ne.s32.totalorder %s74, %s75
    %p86 = scmp.eq.s32.totalorder %s16, 0
    %p87 = por %p85, %p86
    %p88 = scmp.ne.s32.totalorder %s74, %s75
    %p89 = scmp.eq.s32.totalorder %s17, 7
    %p90 = por %p88, %p89
    %p92 = scmp.ne.s32.totalorder %s75, %s91
    %p93 = scmp.eq.s32.totalorder %s17, 0
    %p94 = por %p92, %p93
    %s95 = smul.u32 %s19, 4
    %s96 = sadd.s32 %s95, 4
    %p97 = scmp.lt.s32.totalorder %s96, 15
    %s98 = scalar_select %p97, %s96, 15
    %s99 = smul.u32 %s26, 4
    %s100 = sadd.s32 %s99, 4
    %p101 = scmp.lt.s32.totalorder %s100, 15
    %s102 = scalar_select %p101, %s100, 15
    %s103 = ssub.s32 %s18, %s30
    %s104 = ssub.s32 %s98, %s102
    %s105 = sor.u32 %s103, %s104
    %p106 = scmp.eq.s32.totalorder %s105, 0
    %s108 = sadd.s32 %s107, 1
    %s109 = scalar_select %p106, %s107, %s108
    %p112 = pneg %p106
    %p113 = scmp.eq.s32.totalorder %s11, 7
    %p114 = por %p112, %p113
    %p115 = scmp.ne.s32.totalorder %s107, %s110
    %p116 = scmp.eq.s32.totalorder %s11, 0
    %p117 = por %p115, %p116
    %p118 = scmp.ne.s32.totalorder %s107, %s110
    %p119 = scmp.eq.s32.totalorder %s16, 7
    %p120 = por %p118, %p119
    %p121 = scmp.ne.s32.totalorder %s110, %s111
    %p122 = scmp.eq.s32.totalorder %s16, 0
    %p123 = por %p121, %p122
    %p124 = scmp.ne.s32.totalorder %s110, %s111
    %p125 = scmp.eq.s32.totalorder %s17, 7
    %p126 = por %p124, %p125
    %p128 = scmp.ne.s32.totalorder %s111, %s127
    %p129 = scmp.eq.s32.totalorder %s17, 0
    %p130 = por %p128, %p129
    %s132 = sadd.s32 %s131, 1
    %p135 = scmp.eq.s32.totalorder %s11, 7
    %p136 = scmp.ne.s32.totalorder %s131, %s133
    %p137 = scmp.eq.s32.totalorder %s11, 0
    %p138 = por %p136, %p137
    %p139 = scmp.ne.s32.totalorder %s131, %s133
    %p140 = scmp.eq.s32.totalorder %s16, 7
    %p141 = por %p139, %p140
    %p142 = scmp.ne.s32.totalorder %s133, %s134
    %p143 = scmp.eq.s32.totalorder %s16, 0
    %p144 = por %p142, %p143
    %p145 = scmp.ne.s32.totalorder %s133, %s134
    %p146 = scmp.eq.s32.totalorder %s17, 7
    %p147 = por %p145, %p146
    %p149 = scmp.ne.s32.totalorder %s134, %s148
    %p150 = scmp.eq.s32.totalorder %s17, 0
    %p151 = por %p149, %p150
    %s153 = sadd.s32 %s152, 1
    %p156 = scmp.eq.s32.totalorder %s11, 7
    %p157 = scmp.ne.s32.totalorder %s152, %s154
    %p158 = scmp.eq.s32.totalorder %s11, 0
    %p159 = por %p157, %p158
    %p160 = scmp.ne.s32.totalorder %s152, %s154
    %p161 = scmp.eq.s32.totalorder %s16, 7
    %p162 = por %p160, %p161
    %p163 = scmp.ne.s32.totalorder %s154, %s155
    %p164 = scmp.eq.s32.totalorder %s16, 0
    %p165 = por %p163, %p164
    %p166 = scmp.ne.s32.totalorder %s154, %s155
    %p167 = scmp.eq.s32.totalorder %s17, 7
    %p168 = por %p166, %p167
    %p170 = scmp.ne.s32.totalorder %s155, %s169
    %p171 = scmp.eq.s32.totalorder %s17, 0
    %p172 = por %p170, %p171
    %s173 = ssub.s32 %s18, %s30
    %s174 = ssub.s32 %s19, %s26
    %s175 = sor.u32 %s173, %s174
    %p176 = scmp.eq.s32.totalorder %s175, 0
    %s178 = sadd.s32 %s177, 1
    %s179 = scalar_select %p176, %s177, %s178
    %p182 = pneg %p176
    %p183 = scmp.eq.s32.totalorder %s11, 7
    %p184 = por %p182, %p183
    %p185 = scmp.ne.s32.totalorder %s177, %s180
    %p186 = scmp.eq.s32.totalorder %s11, 0
    %p187 = por %p185, %p186
    %p188 = scmp.ne.s32.totalorder %s177, %s180
    %p189 = scmp.eq.s32.totalorder %s16, 7
    %p190 = por %p188, %p189
    %p191 = scmp.ne.s32.totalorder %s180, %s181
    %p192 = scmp.eq.s32.totalorder %s16, 0
    %p193 = por %p191, %p192
    %p194 = scmp.ne.s32.totalorder %s180, %s181
    %p195 = scmp.eq.s32.totalorder %s17, 7
    %p196 = por %p194, %p195
    %p198 = scmp.ne.s32.totalorder %s181, %s197
    %p199 = scmp.eq.s32.totalorder %s17, 0
    %p200 = por %p198, %p199
    %p201 = scmp.le.s32.totalorder 1, %s11
    %p202 = scmp.lt.s32.totalorder %s11, 9
    %p203 = pnand %p201, %p202
    %p204 = pneg %p203
    // Predicated region
    $region9: #{tpu_custom_call.1} parent=5 // pred_check
      _
    $region10: #{tpu_custom_call.1} parent=5 // pred_check_branch
      %206 = sbr.rel (%p203) target = $region12
    $region11: #{tpu_custom_call.1} parent=5 // pred_region
      %s207 = ssub.s32 %s11, 1
      // Predicated region
      $region13: #{tpu_custom_call.1} parent=11 // pred_check
        %p208 = pneg %p144
      $region14: #{tpu_custom_call.1} parent=11 // pred_check_branch
        %210 = sbr.rel (%p208) target = $region16
      $region15: #{tpu_custom_call.1} parent=11 // pred_region
        _
      $region16: #{tpu_custom_call.1} parent=11 // pred_fallthru
        _
      // Predicated region
      $region17: #{tpu_custom_call.1} parent=11 // pred_check
        %p211 = pneg %p165
      $region18: #{tpu_custom_call.1} parent=11 // pred_check_branch
        %213 = sbr.rel (%p211) target = $region20
      $region19: #{tpu_custom_call.1} parent=11 // pred_region
        _
      $region20: #{tpu_custom_call.1} parent=11 // pred_fallthru
        _
    $region12: #{tpu_custom_call.1} parent=5 // pred_fallthru
      _
    %p214 = scmp.lt.s32.totalorder %s11, 8
    // Predicated region
    $region21: #{tpu_custom_call.1} parent=5 // pred_check
      %p215 = pneg %p214
    $region22: #{tpu_custom_call.1} parent=5 // pred_check_branch
      %217 = sbr.rel (%p215) target = $region24
    $region23: #{tpu_custom_call.1} parent=5 // pred_region
      // Predicated region
      $region25: #{tpu_custom_call.1} parent=23 // pred_check
        %p218 = pneg %p45
      $region26: #{tpu_custom_call.1} parent=23 // pred_check_branch
        %220 = sbr.rel (%p218) target = $region28
      $region27: #{tpu_custom_call.1} parent=23 // pred_region
        %s221 = smul.u32 4, %s19
        %p222 = scmp.lt.s32.totalorder %s18, 1
        %s223 = scalar_select %p222, %s18, 1
        %p224 = scmp.lt.s32.totalorder %s221, 15
        %s225 = scalar_select %p224, %s221, 15
        %s226 = smul.addr %s225, 2
        %s227 = smul.addr %s223, 32
        %s228 = sadd.s32 %s226, %s227
        %s229 = smul.addr %s228, 8
        %s230 = scalar_lea.vmem %s0, %s229
        %s231 = smul.u32 4, %s19
      $region28: #{tpu_custom_call.1} parent=23 // pred_fallthru
        _
      // Predicated region
      $region29: #{tpu_custom_call.1} parent=23 // pred_check
        %p232 = pneg %p81
      $region30: #{tpu_custom_call.1} parent=23 // pred_check_branch
        %234 = sbr.rel (%p232) target = $region32
      $region31: #{tpu_custom_call.1} parent=23 // pred_region
        %s235 = smul.u32 %s19, 4
        %s236 = ssub.s32 %s235, 1
        %p237 = scmp.gt.s32.totalorder %s236, 0
        %s238 = scalar_select %p237, %s236, 0
        %p239 = scmp.lt.s32.totalorder %s18, 1
        %s240 = scalar_select %p239, %s18, 1
        %p241 = scmp.lt.s32.totalorder %s238, 15
        %s242 = scalar_select %p241, %s238, 15
        %s243 = smul.addr %s242, 2
        %s244 = smul.addr %s240, 32
        %s245 = sadd.s32 %s243, %s244
        %s246 = smul.addr %s245, 8
        %s247 = scalar_lea.vmem %s1, %s246
        %s248 = smul.u32 %s19, 4
        %s249 = ssub.s32 %s248, 1
        %p250 = scmp.gt.s32.totalorder %s249, 0
        %s251 = scalar_select %p250, %s249, 0
      $region32: #{tpu_custom_call.1} parent=23 // pred_fallthru
        _
      // Predicated region
      $region33: #{tpu_custom_call.1} parent=23 // pred_check
        %p252 = pneg %p117
      $region34: #{tpu_custom_call.1} parent=23 // pred_check_branch
        %254 = sbr.rel (%p252) target = $region36
      $region35: #{tpu_custom_call.1} parent=23 // pred_region
        %s255 = smul.u32 %s19, 4
        %s256 = sadd.s32 %s255, 4
        %p257 = scmp.lt.s32.totalorder %s256, 15
        %s258 = scalar_select %p257, %s256, 15
        %p259 = scmp.lt.s32.totalorder %s18, 1
        %s260 = scalar_select %p259, %s18, 1
        %p261 = scmp.lt.s32.totalorder %s258, 15
        %s262 = scalar_select %p261, %s258, 15
        %s263 = smul.addr %s262, 2
        %s264 = smul.addr %s260, 32
        %s265 = sadd.s32 %s263, %s264
        %s266 = smul.addr %s265, 8
        %s267 = scalar_lea.vmem %s2, %s266
        %s268 = smul.u32 %s19, 4
        %s269 = sadd.s32 %s268, 4
        %p270 = scmp.lt.s32.totalorder %s269, 15
        %s271 = scalar_select %p270, %s269, 15
      $region36: #{tpu_custom_call.1} parent=23 // pred_fallthru
        _
    $region24: #{tpu_custom_call.1} parent=5 // pred_fallthru
      _
    %p272 = scmp.le.s32.totalorder 1, %s11
    %p273 = scmp.lt.s32.totalorder %s11, 9
    %p274 = pnand %p272, %p273
    %p275 = pneg %p274
    // Predicated region
    $region37: #{tpu_custom_call.1} parent=5 // pred_check
      _
    $region38: #{tpu_custom_call.1} parent=5 // pred_check_branch
      %277 = sbr.rel (%p274) target = $region40
    $region39: #{tpu_custom_call.1} parent=5 // pred_region
      %s278 = ssub.s32 %s11, 1
      %s279 = smul.u32 4, %s21
      %p280 = scmp.lt.s32.totalorder %s20, 1
      %s281 = scalar_select %p280, %s20, 1
      %p282 = scmp.lt.s32.totalorder %s279, 15
      %s283 = scalar_select %p282, %s279, 15
      %s284 = smul.addr %s283, 2
      %s285 = smul.addr %s281, 32
      %s286 = sadd.s32 %s284, %s285
      %s287 = smul.addr %s286, 8
      %s288 = scalar_lea.vmem %s0, %s287
      %p289 = pneg %p51
      %p290 = pneg %p48
      %s291 = smul.u32 %s21, 4
      %s292 = ssub.s32 %s291, 1
      %p293 = scmp.gt.s32.totalorder %s292, 0
      %s294 = scalar_select %p293, %s292, 0
      %p295 = scmp.lt.s32.totalorder %s20, 1
      %s296 = scalar_select %p295, %s20, 1
      %p297 = scmp.lt.s32.totalorder %s294, 15
      %s298 = scalar_select %p297, %s294, 15
      %s299 = smul.addr %s298, 2
      %s300 = smul.addr %s296, 32
      %s301 = sadd.s32 %s299, %s300
      %s302 = smul.addr %s301, 8
      %s303 = scalar_lea.vmem %s1, %s302
      %p304 = pneg %p87
      %p305 = pneg %p84
      %s306 = smul.u32 %s21, 4
      %s307 = sadd.s32 %s306, 4
      %p308 = scmp.lt.s32.totalorder %s307, 15
      %s309 = scalar_select %p308, %s307, 15
      %p310 = scmp.lt.s32.totalorder %s20, 1
      %s311 = scalar_select %p310, %s20, 1
      %p312 = scmp.lt.s32.totalorder %s309, 15
      %s313 = scalar_select %p312, %s309, 15
      %s314 = smul.addr %s313, 2
      %s315 = smul.addr %s311, 32
      %s316 = sadd.s32 %s314, %s315
      %s317 = smul.addr %s316, 8
      %s318 = scalar_lea.vmem %s2, %s317
      %p319 = pneg %p123
      %p320 = pneg %p120
      %p321 = pneg %p144
      %p322 = pneg %p141
      %p323 = pneg %p165
      %p324 = pneg %p162
      %p325 = pneg %p193
      %p326 = pneg %p190
      %s327 = smul.u32 4, %s21
      %p328 = scmp.lt.s32.totalorder %s20, 1
      %s329 = scalar_select %p328, %s20, 1
      %p330 = scmp.lt.s32.totalorder %s327, 15
      %s331 = scalar_select %p330, %s327, 15
      %s332 = smul.addr %s331, 4
      %s333 = smul.addr %s329, 64
      %s334 = sadd.s32 %s332, %s333
      %s335 = smul.addr %s334, 8
      %s336 = scalar_lea.vmem %s5, %s335
      %s337 = smul.u32 4, %s21
      %p338 = scmp.lt.s32.totalorder %s20, 1
      %s339 = scalar_select %p338, %s20, 1
      %p340 = scmp.lt.s32.totalorder %s337, 15
      %s341 = scalar_select %p340, %s337, 15
      %s342 = smul.addr %s341, 2
      %s343 = smul.addr %s339, 32
      %s344 = sadd.s32 %s342, %s343
      %s345 = smul.addr %s344, 8
      %s346 = scalar_lea.vmem %s0, %s345
      %s347 = smul.u32 4, %s21
      %s348 = smul.u32 %s21, 4
      %s349 = ssub.s32 %s348, 1
      %p350 = scmp.gt.s32.totalorder %s349, 0
      %s351 = scalar_select %p350, %s349, 0
      %p352 = scmp.lt.s32.totalorder %s20, 1
      %s353 = scalar_select %p352, %s20, 1
      %p354 = scmp.lt.s32.totalorder %s351, 15
      %s355 = scalar_select %p354, %s351, 15
      %s356 = smul.addr %s355, 2
      %s357 = smul.addr %s353, 32
      %s358 = sadd.s32 %s356, %s357
      %s359 = smul.addr %s358, 8
      %s360 = scalar_lea.vmem %s1, %s359
      %s361 = smul.u32 %s21, 4
      %s362 = ssub.s32 %s361, 1
      %p363 = scmp.gt.s32.totalorder %s362, 0
      %s364 = scalar_select %p363, %s362, 0
      %s365 = smul.u32 %s21, 4
      %s366 = sadd.s32 %s365, 4
      %p367 = scmp.lt.s32.totalorder %s366, 15
      %s368 = scalar_select %p367, %s366, 15
      %p369 = scmp.lt.s32.totalorder %s20, 1
      %s370 = scalar_select %p369, %s20, 1
      %p371 = scmp.lt.s32.totalorder %s368, 15
      %s372 = scalar_select %p371, %s368, 15
      %s373 = smul.addr %s372, 2
      %s374 = smul.addr %s370, 32
      %s375 = sadd.s32 %s373, %s374
      %s376 = smul.addr %s375, 8
      %s377 = scalar_lea.vmem %s2, %s376
      %s378 = smul.u32 %s21, 4
      %s379 = sadd.s32 %s378, 4
      %p380 = scmp.lt.s32.totalorder %s379, 15
      %s381 = scalar_select %p380, %s379, 15
      %s382 = smul.u32 4, %s21
      %p383 = scmp.lt.s32.totalorder %s20, 1
      %s384 = scalar_select %p383, %s20, 1
      %p385 = scmp.lt.s32.totalorder %s382, 15
      %s386 = scalar_select %p385, %s382, 15
      %s387 = smul.addr %s386, 4
      %s388 = smul.addr %s384, 64
      %s389 = sadd.s32 %s387, %s388
      %s390 = smul.addr %s389, 8
      %s391 = scalar_lea.vmem %s5, %s390
      %s392 = smul.u32 4, %s21
      %v393 = vld [vmem:[%s346] sm:$0xff]
      %v394 = vld [vmem:[%s346 + $0x8] sm:$0xff]
      %v395 = vld [vmem:[%s346 + $0x10] sm:$0xff]
      %v396 = vld [vmem:[%s346 + $0x18] sm:$0xff]
      %v397 = vld [vmem:[%s346 + $0x20] sm:$0xff]
      %v398 = vld [vmem:[%s346 + $0x28] sm:$0xff]
      %v399 = vld [vmem:[%s346 + $0x30] sm:$0xff]
      %v400 = vld [vmem:[%s346 + $0x38] sm:$0xff]
      %p401 = scmp.gt.s32.totalorder %s21, 0
      %s402 = scalar_select %p401, 1, 0
      %s403 = scvt.s32.f32 %s402
      %p404 = scmp.lt.s32.totalorder %s21, 3
      %s405 = scalar_select %p404, 1, 0
      %s406 = scvt.s32.f32 %s405
      %v407 = vld [vmem:[%s360] sm:$0xff]
      %v408 = vld [vmem:[%s360 + $0x8] sm:$0xff]
      %v409 = vstv %s403
      %v410 = vmul.f32 %v407, %v409
      %v411 = vmul.f32 %v408, %v409
      %v412 = vld [vmem:[%s377] sm:$0xff]
      %v413 = vld [vmem:[%s377 + $0x8] sm:$0xff]
      %v414 = vstv %s406
      %v415 = vmul.f32 %v412, %v414
      %v416 = vmul.f32 %v413, %v414
      %v417 = vlaneseq
      %v418 = vshrl.u32 %v417, 7
      %v419 = vadd.s32 %v418, 8
      %vm420 = vcmp.eq.s32.totalorder %v418, 0
      %vm421 = vcmp.eq.s32.totalorder %v419, 0
      %vm422 = vcmp.eq.s32.totalorder %v418, 15
      %vm423 = vcmp.eq.s32.totalorder %v419, 15
      %v424 = vrot.slane %v410, 7
      %v425 = vrot.slane %v393, 7
      %v426 = vrot.slane %v395, 7
      %v427 = vrot.slane %v397, 7
      %v428 = vrot.slane %v411, 7
      %v429 = vrot.slane %v394, 7
      %v430 = vrot.slane %v396, 7
      %v431 = vrot.slane %v398, 7
      %vm432 = vcmp.lt.s32.totalorder %v418, 1
      %v433 = vsel %vm432, %v424, %v428
      %v434 = vsel %vm432, %v425, %v429
      %v435 = vsel %vm432, %v426, %v430
      %v436 = vsel %vm432, %v427, %v431
      %v437 = vsel %vm432, %v428, %v424
      %v438 = vsel %vm432, %v429, %v425
      %v439 = vsel %vm432, %v430, %v426
      %v440 = vsel %vm432, %v431, %v427
      %v441 = vsel %vm420, 1, 0
      %v442 = vsel %vm421, 1, 0
      %vm443 = vcmp.eq.s32.totalorder %v441, 1
      %vm444 = vcmp.eq.s32.totalorder %v442, 1
      %v445 = vsel %vm443, 0.0, %v437
      %v446 = vsel %vm444, 0.0, %v433
      %v447 = vsel %vm443, 0.0, %v438
      %v448 = vsel %vm444, 0.0, %v434
      %v449 = vsel %vm443, 0.0, %v439
      %v450 = vsel %vm444, 0.0, %v435
      %v451 = vsel %vm443, 0.0, %v440
      %v452 = vsel %vm444, 0.0, %v436
      %v453 = vrot.slane %v410, 1
      %v454 = vrot.slane %v393, 1
      %v455 = vrot.slane %v395, 1
      %v456 = vrot.slane %v397, 1
      %v457 = vrot.slane %v411, 1
      %v458 = vrot.slane %v394, 1
      %v459 = vrot.slane %v396, 1
      %v460 = vrot.slane %v398, 1
      %vm461 = vcmp.lt.s32.totalorder %v418, 7
      %v462 = vsel %vm461, %v453, %v457
      %v463 = vsel %vm461, %v454, %v458
      %v464 = vsel %vm461, %v455, %v459
      %v465 = vsel %vm461, %v456, %v460
      %v466 = vsel %vm461, %v457, %v453
      %v467 = vsel %vm461, %v458, %v454
      %v468 = vsel %vm461, %v459, %v455
      %v469 = vsel %vm461, %v460, %v456
      %v470 = vsel %vm422, 1, 0
      %v471 = vsel %vm423, 1, 0
      %vm472 = vcmp.eq.s32.totalorder %v470, 1
      %vm473 = vcmp.eq.s32.totalorder %v471, 1
      %v474 = vsel %vm472, 0.0, %v462
      %v475 = vsel %vm473, 0.0, %v466
      %v476 = vsel %vm472, 0.0, %v463
      %v477 = vsel %vm473, 0.0, %v467
      %v478 = vsel %vm472, 0.0, %v464
      %v479 = vsel %vm473, 0.0, %v468
      %v480 = vsel %vm472, 0.0, %v465
      %v481 = vsel %vm473, 0.0, %v469
      %v482 = vrot.slane %v399, 7
      %v483 = vrot.slane %v400, 7
      %v484 = vsel %vm432, %v482, %v483
      %v485 = vsel %vm432, %v483, %v482
      %v486 = vsel %vm443, 0.0, %v485
      %v487 = vsel %vm444, 0.0, %v484
      %v488 = vrot.slane %v399, 1
      %v489 = vrot.slane %v400, 1
      %v490 = vsel %vm461, %v488, %v489
      %v491 = vsel %vm461, %v489, %v488
      %v492 = vsel %vm472, 0.0, %v490
      %v493 = vsel %vm473, 0.0, %v491
      %v494 = vrot.slane %v415, 7
      %v495 = vrot.slane %v416, 7
      %v496 = vsel %vm432, %v494, %v495
      %v497 = vsel %vm432, %v495, %v494
      %v498 = vsel %vm443, 0.0, %v497
      %v499 = vsel %vm444, 0.0, %v496
      %v500 = vrot.slane %v415, 1
      %v501 = vrot.slane %v416, 1
      %v502 = vsel %vm461, %v500, %v501
      %v503 = vsel %vm461, %v501, %v500
      %v504 = vsel %vm472, 0.0, %v502
      %v505 = vsel %vm473, 0.0, %v503
      %v506 = vld [vmem:[%s4] sm:$0x1]
      %v507 = vld [vmem:[%s3] sm:$0xf]
      %s508 = scalar_lea.vmem %s3, 4
      %v509 = vld [vmem:[%s508] sm:$0xf]
      %vm510 = vcmask 31744
      %v512 = vsel %vm510, %v410, 0
      %v515 = vsel %vm510, %v411, 0
      %v518 = vsel %vm510, %v393, 0
      %v521 = vsel %vm510, %v394, 0
      %v524 = vsel %vm510, %v395, 0
      %v527 = vsel %vm510, %v396, 0
      %v530 = vsel %vm510, %v397, 0
      %v533 = vsel %vm510, %v398, 0
      %vm535 = vcmask 1043456
      %v537 = vsel %vm535, %v509, 0
      %539 = vmatprep.subr.mxu0 0.0
      %540 = vmatpush1.msra.mxu0 %v537
      %541 = vmatprep.subr.mxu0 0.0
      %542 = vmatpush1.msra.mxu0 0.0
      %543 = vmatprep.subr.mxu0 0.0
      %544 = vmatpush1.msra.mxu0 0.0
      %545 = vmatprep.subr.mxu0 0.0
      %546 = vmatpush1.msra.mxu0 0.0
      %547 = vmatprep.subr.mxu0 0.0
      %548 = vmatpush1.msra.mxu0 0.0
      %549 = vmatprep.subr.mxu0 0.0
      %550 = vmatpush1.msra.mxu0 0.0
      %551 = vmatprep.subr.mxu0 0.0
      %552 = vmatpush1.msra.mxu0 0.0
      %553 = vmatprep.subr.mxu0 0.0
      %554 = vmatpush1.msra.mxu0 0.0
      %555 = vmatprep.subr.mxu0 0.0
      %556 = vmatpush1.msra.mxu0 0.0
      %557 = vmatprep.subr.mxu0 0.0
      %558 = vmatpush1.msra.mxu0 0.0
      %559 = vmatprep.subr.mxu0 0.0
      %560 = vmatpush1.msra.mxu0 0.0
      %561 = vmatprep.subr.mxu0 0.0
      %562 = vmatpush1.msra.mxu0 0.0
      %563 = vmatprep.subr.mxu0 0.0
      %564 = vmatpush1.msra.mxu0 0.0
      %565 = vmatprep.subr.mxu0 0.0
      %566 = vmatpush1.msra.mxu0 0.0
      %567 = vmatprep.subr.mxu0 0.0
      %568 = vmatpush1.msra.mxu0 0.0
      %569 = vmatprep.subr.mxu0 0.0
      %570 = vmatpush1.msra.mxu0 0.0
      %571 = vmatprep.subr.mxu0 0.0
      %572 = vmatpush1.msra.mxu0 0.0
      %573 = vmatprep.subr.mxu0 0.0
      %574 = vmatpush1.msra.mxu0 0.0
      %575 = vmatprep.subr.mxu0 0.0
      %576 = vmatpush1.msra.mxu0 0.0
      %577 = vmatprep.subr.mxu0 0.0
      %578 = vmatpush1.msra.mxu0 0.0
      %579 = vmatprep.subr.mxu0 0.0
      %580 = vmatpush1.msra.mxu0 0.0
      %581 = vmatprep.subr.mxu0 0.0
      %582 = vmatpush1.msra.mxu0 0.0
      %583 = vmatprep.subr.mxu0 0.0
      %584 = vmatpush1.msra.mxu0 0.0
      %585 = vmatprep.subr.mxu0 0.0
      %586 = vmatpush1.msra.mxu0 0.0
      %587 = vmatprep.subr.mxu0 0.0
      %588 = vmatpush1.msra.mxu0 0.0
      %589 = vmatprep.subr.mxu0 0.0
      %590 = vmatpush1.msra.mxu0 0.0
      %591 = vmatprep.subr.mxu0 0.0
      %592 = vmatpush1.msra.mxu0 0.0
      %593 = vmatprep.subr.mxu0 0.0
      %594 = vmatpush1.msra.mxu0 0.0
      %595 = vmatprep.subr.mxu0 0.0
      %596 = vmatpush1.msra.mxu0 0.0
      %597 = vmatprep.subr.mxu0 0.0
      %598 = vmatpush1.msra.mxu0 0.0
      %599 = vmatprep.subr.mxu0 0.0
      %600 = vmatpush1.msra.mxu0 0.0
      %601 = vmatprep.subr.mxu0 0.0
      %602 = vmatpush1.msra.mxu0 0.0
      %603 = vmatprep.mubr.f32.mxu0 0.0
      %604 = vmatmul.mubr.f32.gmra.mrb[0].mxu0 %v512
      %v605 = vpop.f32.mrb[0].mxu0
      %v606 = vadd.f32 0.0, %v605
      %v607 = vpop.f32.mrb[0].mxu0
      %608 = vmatprep.mubr.f32.mxu0 0.0
      %609 = vmatmul.mubr.f32.gmra.mrb[0].mxu0 %v515
      %v610 = vpop.f32.mrb[0].mxu0
      %v611 = vadd.f32 0.0, %v610
      %v612 = vpop.f32.mrb[0].mxu0
      %613 = vmatprep.mubr.f32.mxu0 0.0
      %614 = vmatmul.mubr.f32.gmra.mrb[0].mxu0 %v518
      %v615 = vpop.f32.mrb[0].mxu0
      %v616 = vadd.f32 0.0, %v615
      %v617 = vpop.f32.mrb[0].mxu0
      %618 = vmatprep.mubr.f32.mxu0 0.0
      %619 = vmatmul.mubr.f32.gmra.mrb[0].mxu0 %v521
      %v620 = vpop.f32.mrb[0].mxu0
      %v621 = vadd.f32 0.0, %v620
      %v622 = vpop.f32.mrb[0].mxu0
      %623 = vmatprep.mubr.f32.mxu0 0.0
      %624 = vmatmul.mubr.f32.gmra.mrb[0].mxu0 %v524
      %v625 = vpop.f32.mrb[0].mxu0
      %v626 = vadd.f32 0.0, %v625
      %v627 = vpop.f32.mrb[0].mxu0
      %628 = vmatprep.mubr.f32.mxu0 0.0
      %629 = vmatmul.mubr.f32.gmra.mrb[0].mxu0 %v527
      %v630 = vpop.f32.mrb[0].mxu0
      %v631 = vadd.f32 0.0, %v630
      %v632 = vpop.f32.mrb[0].mxu0
      %633 = vmatprep.mubr.f32.mxu0 0.0
      %634 = vmatmul.mubr.f32.gmra.mrb[0].mxu0 %v530
      %v635 = vpop.f32.mrb[0].mxu0
      %v636 = vadd.f32 0.0, %v635
      %v637 = vpop.f32.mrb[0].mxu0
      %638 = vmatprep.mubr.f32.mxu0 0.0
      %639 = vmatmul.mubr.f32.gmra.mrb[0].mxu0 %v533
      %v640 = vpop.f32.mrb[0].mxu0
      %v641 = vadd.f32 0.0, %v640
      %v642 = vpop.f32.mrb[0].mxu0
      %643 = vdwg.mxu0
      %v645 = vsel %vm510, %v445, 0
      %v648 = vsel %vm510, %v446, 0
      %v651 = vsel %vm510, %v447, 0
      %v654 = vsel %vm510, %v448, 0
      %v657 = vsel %vm510, %v449, 0
      %v660 = vsel %vm510, %v450, 0
      %v663 = vsel %vm510, %v451, 0
      %v666 = vsel %vm510, %v452, 0
      %v669 = vsel %vm535, %v507, 0
      %671 = vmatprep.subr.mxu0 0.0
      %672 = vmatpush1.msra.mxu0 %v669
      %673 = vmatprep.subr.mxu0 0.0
      %674 = vmatpush1.msra.mxu0 0.0
      %675 = vmatprep.subr.mxu0 0.0
      %676 = vmatpush1.msra.mxu0 0.0
      %677 = vmatprep.subr.mxu0 0.0
      %678 = vmatpush1.msra.mxu0 0.0
      %679 = vmatprep.subr.mxu0 0.0
      %680 = vmatpush1.msra.mxu0 0.0
      %681 = vmatprep.subr.mxu0 0.0
      %682 = vmatpush1.msra.mxu0 0.0
      %683 = vmatprep.subr.mxu0 0.0
      %684 = vmatpush1.msra.mxu0 0.0
      %685 = vmatprep.subr.mxu0 0.0
      %686 = vmatpush1.msra.mxu0 0.0
      %687 = vmatprep.subr.mxu0 0.0
      %688 = vmatpush1.msra.mxu0 0.0
      %689 = vmatprep.subr.mxu0 0.0
      %690 = vmatpush1.msra.mxu0 0.0
      %691 = vmatprep.subr.mxu0 0.0
      %692 = vmatpush1.msra.mxu0 0.0
      %693 = vmatprep.subr.mxu0 0.0
      %694 = vmatpush1.msra.mxu0 0.0
      %695 = vmatprep.subr.mxu0 0.0
      %696 = vmatpush1.msra.mxu0 0.0
      %697 = vmatprep.subr.mxu0 0.0
      %698 = vmatpush1.msra.mxu0 0.0
      %699 = vmatprep.subr.mxu0 0.0
      %700 = vmatpush1.msra.mxu0 0.0
      %701 = vmatprep.subr.mxu0 0.0
      %702 = vmatpush1.msra.mxu0 0.0
      %703 = vmatprep.subr.mxu0 0.0
      %704 = vmatpush1.msra.mxu0 0.0
      %705 = vmatprep.subr.mxu0 0.0
      %706 = vmatpush1.msra.mxu0 0.0
      %707 = vmatprep.subr.mxu0 0.0
      %708 = vmatpush1.msra.mxu0 0.0
      %709 = vmatprep.subr.mxu0 0.0
      %710 = vmatpush1.msra.mxu0 0.0
      %711 = vmatprep.subr.mxu0 0.0
      %712 = vmatpush1.msra.mxu0 0.0
      %713 = vmatprep.subr.mxu0 0.0
      %714 = vmatpush1.msra.mxu0 0.0
      %715 = vmatprep.subr.mxu0 0.0
      %716 = vmatpush1.msra.mxu0 0.0
      %717 = vmatprep.subr.mxu0 0.0
      %718 = vmatpush1.msra.mxu0 0.0
      %719 = vmatprep.subr.mxu0 0.0
      %720 = vmatpush1.msra.mxu0 0.0
      %721 = vmatprep.subr.mxu0 0.0
      %722 = vmatpush1.msra.mxu0 0.0
      %723 = vmatprep.subr.mxu0 0.0
      %724 = vmatpush1.msra.mxu0 0.0
      %725 = vmatprep.subr.mxu0 0.0
      %726 = vmatpush1.msra.mxu0 0.0
      %727 = vmatprep.subr.mxu0 0.0
      %728 = vmatpush1.msra.mxu0 0.0
      %729 = vmatprep.subr.mxu0 0.0
      %730 = vmatpush1.msra.mxu0 0.0
      %731 = vmatprep.subr.mxu0 0.0
      %732 = vmatpush1.msra.mxu0 0.0
      %733 = vmatprep.subr.mxu0 0.0
      %734 = vmatpush1.msra.mxu0 0.0
      %735 = vmatprep.mubr.f32.mxu0 0.0
      %736 = vmatmul.mubr.f32.gmra.mrb[0].mxu0 %v645
      %v737 = vpop.f32.mrb[0].mxu0
      %v738 = vadd.f32 %v606, %v737
      %v739 = vpop.f32.mrb[0].mxu0
      %740 = vmatprep.mubr.f32.mxu0 0.0
      %741 = vmatmul.mubr.f32.gmra.mrb[0].mxu0 %v648
      %v742 = vpop.f32.mrb[0].mxu0
      %v743 = vadd.f32 %v611, %v742
      %v744 = vpop.f32.mrb[0].mxu0
      %745 = vmatprep.mubr.f32.mxu0 0.0
      %746 = vmatmul.mubr.f32.gmra.mrb[0].mxu0 %v651
      %v747 = vpop.f32.mrb[0].mxu0
      %v748 = vadd.f32 %v616, %v747
      %v749 = vpop.f32.mrb[0].mxu0
      %750 = vmatprep.mubr.f32.mxu0 0.0
      %751 = vmatmul.mubr.f32.gmra.mrb[0].mxu0 %v654
      %v752 = vpop.f32.mrb[0].mxu0
      %v753 = vadd.f32 %v621, %v752
      %v754 = vpop.f32.mrb[0].mxu0
      %755 = vmatprep.mubr.f32.mxu0 0.0
      %756 = vmatmul.mubr.f32.gmra.mrb[0].mxu0 %v657
      %v757 = vpop.f32.mrb[0].mxu0
      %v758 = vadd.f32 %v626, %v757
      %v759 = vpop.f32.mrb[0].mxu0
      %760 = vmatprep.mubr.f32.mxu0 0.0
      %761 = vmatmul.mubr.f32.gmra.mrb[0].mxu0 %v660
      %v762 = vpop.f32.mrb[0].mxu0
      %v763 = vadd.f32 %v631, %v762
      %v764 = vpop.f32.mrb[0].mxu0
      %765 = vmatprep.mubr.f32.mxu0 0.0
      %766 = vmatmul.mubr.f32.gmra.mrb[0].mxu0 %v663
      %v767 = vpop.f32.mrb[0].mxu0
      %v768 = vadd.f32 %v636, %v767
      %v769 = vpop.f32.mrb[0].mxu0
      %770 = vmatprep.mubr.f32.mxu0 0.0
      %771 = vmatmul.mubr.f32.gmra.mrb[0].mxu0 %v666
      %v772 = vpop.f32.mrb[0].mxu0
      %v773 = vadd.f32 %v641, %v772
      %v774 = vpop.f32.mrb[0].mxu0
      %775 = vdwg.mxu0
      %s776 = scalar_lea.vmem %s3, 8
      %v777 = vld [vmem:[%s776] sm:$0xf]
      %v779 = vsel %vm510, %v486, 0
      %v782 = vsel %vm510, %v487, 0
      %v785 = vsel %vm535, %v777, 0
      %787 = vmatprep.subr.mxu0 0.0
      %788 = vmatpush1.msra.mxu0 %v785
      %789 = vmatprep.subr.mxu0 0.0
      %790 = vmatpush1.msra.mxu0 0.0
      %791 = vmatprep.subr.mxu0 0.0
      %792 = vmatpush1.msra.mxu0 0.0
      %793 = vmatprep.subr.mxu0 0.0
      %794 = vmatpush1.msra.mxu0 0.0
      %795 = vmatprep.subr.mxu0 0.0
      %796 = vmatpush1.msra.mxu0 0.0
      %797 = vmatprep.subr.mxu0 0.0
      %798 = vmatpush1.msra.mxu0 0.0
      %799 = vmatprep.subr.mxu0 0.0
      %800 = vmatpush1.msra.mxu0 0.0
      %801 = vmatprep.subr.mxu0 0.0
      %802 = vmatpush1.msra.mxu0 0.0
      %803 = vmatprep.subr.mxu0 0.0
      %804 = vmatpush1.msra.mxu0 0.0
      %805 = vmatprep.subr.mxu0 0.0
      %806 = vmatpush1.msra.mxu0 0.0
      %807 = vmatprep.subr.mxu0 0.0
      %808 = vmatpush1.msra.mxu0 0.0
      %809 = vmatprep.subr.mxu0 0.0
      %810 = vmatpush1.msra.mxu0 0.0
      %811 = vmatprep.subr.mxu0 0.0
      %812 = vmatpush1.msra.mxu0 0.0
      %813 = vmatprep.subr.mxu0 0.0
      %814 = vmatpush1.msra.mxu0 0.0
      %815 = vmatprep.subr.mxu0 0.0
      %816 = vmatpush1.msra.mxu0 0.0
      %817 = vmatprep.subr.mxu0 0.0
      %818 = vmatpush1.msra.mxu0 0.0
      %819 = vmatprep.subr.mxu0 0.0
      %820 = vmatpush1.msra.mxu0 0.0
      %821 = vmatprep.subr.mxu0 0.0
      %822 = vmatpush1.msra.mxu0 0.0
      %823 = vmatprep.subr.mxu0 0.0
      %824 = vmatpush1.msra.mxu0 0.0
      %825 = vmatprep.subr.mxu0 0.0
      %826 = vmatpush1.msra.mxu0 0.0
      %827 = vmatprep.subr.mxu0 0.0
      %828 = vmatpush1.msra.mxu0 0.0
      %829 = vmatprep.subr.mxu0 0.0
      %830 = vmatpush1.msra.mxu0 0.0
      %831 = vmatprep.subr.mxu0 0.0
      %832 = vmatpush1.msra.mxu0 0.0
      %833 = vmatprep.subr.mxu0 0.0
      %834 = vmatpush1.msra.mxu0 0.0
      %835 = vmatprep.subr.mxu0 0.0
      %836 = vmatpush1.msra.mxu0 0.0
      %837 = vmatprep.subr.mxu0 0.0
      %838 = vmatpush1.msra.mxu0 0.0
      %839 = vmatprep.subr.mxu0 0.0
      %840 = vmatpush1.msra.mxu0 0.0
      %841 = vmatprep.subr.mxu0 0.0
      %842 = vmatpush1.msra.mxu0 0.0
      %843 = vmatprep.subr.mxu0 0.0
      %844 = vmatpush1.msra.mxu0 0.0
      %845 = vmatprep.subr.mxu0 0.0
      %846 = vmatpush1.msra.mxu0 0.0
      %847 = vmatprep.subr.mxu0 0.0
      %848 = vmatpush1.msra.mxu0 0.0
      %849 = vmatprep.subr.mxu0 0.0
      %850 = vmatpush1.msra.mxu0 0.0
      %851 = vmatprep.mubr.f32.mxu0 0.0
      %852 = vmatmul.mubr.f32.gmra.mrb[0].mxu0 %v651
      %v853 = vpop.f32.mrb[0].mxu0
      %v854 = vadd.f32 0.0, %v853
      %v855 = vpop.f32.mrb[0].mxu0
      %856 = vmatprep.mubr.f32.mxu0 0.0
      %857 = vmatmul.mubr.f32.gmra.mrb[0].mxu0 %v654
      %v858 = vpop.f32.mrb[0].mxu0
      %v859 = vadd.f32 0.0, %v858
      %v860 = vpop.f32.mrb[0].mxu0
      %861 = vmatprep.mubr.f32.mxu0 0.0
      %862 = vmatmul.mubr.f32.gmra.mrb[0].mxu0 %v657
      %v863 = vpop.f32.mrb[0].mxu0
      %v864 = vadd.f32 0.0, %v863
      %v865 = vpop.f32.mrb[0].mxu0
      %866 = vmatprep.mubr.f32.mxu0 0.0
      %867 = vmatmul.mubr.f32.gmra.mrb[0].mxu0 %v660
      %v868 = vpop.f32.mrb[0].mxu0
      %v869 = vadd.f32 0.0, %v868
      %v870 = vpop.f32.mrb[0].mxu0
      %871 = vmatprep.mubr.f32.mxu0 0.0
      %872 = vmatmul.mubr.f32.gmra.mrb[0].mxu0 %v663
      %v873 = vpop.f32.mrb[0].mxu0
      %v874 = vadd.f32 0.0, %v873
      %v875 = vpop.f32.mrb[0].mxu0
      %876 = vmatprep.mubr.f32.mxu0 0.0
      %877 = vmatmul.mubr.f32.gmra.mrb[0].mxu0 %v666
      %v878 = vpop.f32.mrb[0].mxu0
      %v879 = vadd.f32 0.0, %v878
      %v880 = vpop.f32.mrb[0].mxu0
      %881 = vmatprep.mubr.f32.mxu0 0.0
      %882 = vmatmul.mubr.f32.gmra.mrb[0].mxu0 %v779
      %v883 = vpop.f32.mrb[0].mxu0
      %v884 = vadd.f32 0.0, %v883
      %v885 = vpop.f32.mrb[0].mxu0
      %886 = vmatprep.mubr.f32.mxu0 0.0
      %887 = vmatmul.mubr.f32.gmra.mrb[0].mxu0 %v782
      %v888 = vpop.f32.mrb[0].mxu0
      %v889 = vadd.f32 0.0, %v888
      %v890 = vpop.f32.mrb[0].mxu0
      %891 = vdwg.mxu0
      %v892 = vadd.f32 %v738, %v854
      %v893 = vadd.f32 %v743, %v859
      %v894 = vadd.f32 %v748, %v864
      %v895 = vadd.f32 %v753, %v869
      %v896 = vadd.f32 %v758, %v874
      %v897 = vadd.f32 %v763, %v879
      %v898 = vadd.f32 %v768, %v884
      %v899 = vadd.f32 %v773, %v889
      %s900 = scalar_lea.vmem %s3, 12
      %v901 = vld [vmem:[%s900] sm:$0xf]
      %v903 = vsel %vm510, %v399, 0
      %v906 = vsel %vm510, %v400, 0
      %v909 = vsel %vm535, %v901, 0
      %911 = vmatprep.subr.mxu0 0.0
      %912 = vmatpush1.msra.mxu0 %v909
      %913 = vmatprep.subr.mxu0 0.0
      %914 = vmatpush1.msra.mxu0 0.0
      %915 = vmatprep.subr.mxu0 0.0
      %916 = vmatpush1.msra.mxu0 0.0
      %917 = vmatprep.subr.mxu0 0.0
      %918 = vmatpush1.msra.mxu0 0.0
      %919 = vmatprep.subr.mxu0 0.0
      %920 = vmatpush1.msra.mxu0 0.0
      %921 = vmatprep.subr.mxu0 0.0
      %922 = vmatpush1.msra.mxu0 0.0
      %923 = vmatprep.subr.mxu0 0.0
      %924 = vmatpush1.msra.mxu0 0.0
      %925 = vmatprep.subr.mxu0 0.0
      %926 = vmatpush1.msra.mxu0 0.0
      %927 = vmatprep.subr.mxu0 0.0
      %928 = vmatpush1.msra.mxu0 0.0
      %929 = vmatprep.subr.mxu0 0.0
      %930 = vmatpush1.msra.mxu0 0.0
      %931 = vmatprep.subr.mxu0 0.0
      %932 = vmatpush1.msra.mxu0 0.0
      %933 = vmatprep.subr.mxu0 0.0
      %934 = vmatpush1.msra.mxu0 0.0
      %935 = vmatprep.subr.mxu0 0.0
      %936 = vmatpush1.msra.mxu0 0.0
      %937 = vmatprep.subr.mxu0 0.0
      %938 = vmatpush1.msra.mxu0 0.0
      %939 = vmatprep.subr.mxu0 0.0
      %940 = vmatpush1.msra.mxu0 0.0
      %941 = vmatprep.subr.mxu0 0.0
      %942 = vmatpush1.msra.mxu0 0.0
      %943 = vmatprep.subr.mxu0 0.0
      %944 = vmatpush1.msra.mxu0 0.0
      %945 = vmatprep.subr.mxu0 0.0
      %946 = vmatpush1.msra.mxu0 0.0
      %947 = vmatprep.subr.mxu0 0.0
      %948 = vmatpush1.msra.mxu0 0.0
      %949 = vmatprep.subr.mxu0 0.0
      %950 = vmatpush1.msra.mxu0 0.0
      %951 = vmatprep.subr.mxu0 0.0
      %952 = vmatpush1.msra.mxu0 0.0
      %953 = vmatprep.subr.mxu0 0.0
      %954 = vmatpush1.msra.mxu0 0.0
      %955 = vmatprep.subr.mxu0 0.0
      %956 = vmatpush1.msra.mxu0 0.0
      %957 = vmatprep.subr.mxu0 0.0
      %958 = vmatpush1.msra.mxu0 0.0
      %959 = vmatprep.subr.mxu0 0.0
      %960 = vmatpush1.msra.mxu0 0.0
      %961 = vmatprep.subr.mxu0 0.0
      %962 = vmatpush1.msra.mxu0 0.0
      %963 = vmatprep.subr.mxu0 0.0
      %964 = vmatpush1.msra.mxu0 0.0
      %965 = vmatprep.subr.mxu0 0.0
      %966 = vmatpush1.msra.mxu0 0.0
      %967 = vmatprep.subr.mxu0 0.0
      %968 = vmatpush1.msra.mxu0 0.0
      %969 = vmatprep.subr.mxu0 0.0
      %970 = vmatpush1.msra.mxu0 0.0
      %971 = vmatprep.subr.mxu0 0.0
      %972 = vmatpush1.msra.mxu0 0.0
      %973 = vmatprep.subr.mxu0 0.0
      %974 = vmatpush1.msra.mxu0 0.0
      %975 = vmatprep.mubr.f32.mxu0 0.0
      %976 = vmatmul.mubr.f32.gmra.mrb[0].mxu0 %v518
      %v977 = vpop.f32.mrb[0].mxu0
      %v978 = vadd.f32 0.0, %v977
      %v979 = vpop.f32.mrb[0].mxu0
      %980 = vmatprep.mubr.f32.mxu0 0.0
      %981 = vmatmul.mubr.f32.gmra.mrb[0].mxu0 %v521
      %v982 = vpop.f32.mrb[0].mxu0
      %v983 = vadd.f32 0.0, %v982
      %v984 = vpop.f32.mrb[0].mxu0
      %985 = vmatprep.mubr.f32.mxu0 0.0
      %986 = vmatmul.mubr.f32.gmra.mrb[0].mxu0 %v524
      %v987 = vpop.f32.mrb[0].mxu0
      %v988 = vadd.f32 0.0, %v987
      %v989 = vpop.f32.mrb[0].mxu0
      %990 = vmatprep.mubr.f32.mxu0 0.0
      %991 = vmatmul.mubr.f32.gmra.mrb[0].mxu0 %v527
      %v992 = vpop.f32.mrb[0].mxu0
      %v993 = vadd.f32 0.0, %v992
      %v994 = vpop.f32.mrb[0].mxu0
      %995 = vmatprep.mubr.f32.mxu0 0.0
      %996 = vmatmul.mubr.f32.gmra.mrb[0].mxu0 %v530
      %v997 = vpop.f32.mrb[0].mxu0
      %v998 = vadd.f32 0.0, %v997
      %v999 = vpop.f32.mrb[0].mxu0
      %1000 = vmatprep.mubr.f32.mxu0 0.0
      %1001 = vmatmul.mubr.f32.gmra.mrb[0].mxu0 %v533
      %v1002 = vpop.f32.mrb[0].mxu0
      %v1003 = vadd.f32 0.0, %v1002
      %v1004 = vpop.f32.mrb[0].mxu0
      %1005 = vmatprep.mubr.f32.mxu0 0.0
      %1006 = vmatmul.mubr.f32.gmra.mrb[0].mxu0 %v903
      %v1007 = vpop.f32.mrb[0].mxu0
      %v1008 = vadd.f32 0.0, %v1007
      %v1009 = vpop.f32.mrb[0].mxu0
      %1010 = vmatprep.mubr.f32.mxu0 0.0
      %1011 = vmatmul.mubr.f32.gmra.mrb[0].mxu0 %v906
      %v1012 = vpop.f32.mrb[0].mxu0
      %v1013 = vadd.f32 0.0, %v1012
      %v1014 = vpop.f32.mrb[0].mxu0
      %1015 = vdwg.mxu0
      %v1016 = vadd.f32 %v892, %v978
      %v1017 = vadd.f32 %v893, %v983
      %v1018 = vadd.f32 %v894, %v988
      %v1019 = vadd.f32 %v895, %v993
      %v1020 = vadd.f32 %v896, %v998
      %v1021 = vadd.f32 %v897, %v1003
      %v1022 = vadd.f32 %v898, %v1008
      %v1023 = vadd.f32 %v899, %v1013
      %v1025 = vlaneseq
      %v1026 = vshrl.u32 %v1025, 7
      %v1027 = vsub.s32 0, %v1026
      %v1028 = vrot.slane %v506, %v1027
      %v1030 = vadd.f32 %v1016, %v1028
      %v1031 = vadd.f32 %v1017, %v1028
      %v1032 = vadd.f32 %v1018, %v1028
      %v1033 = vadd.f32 %v1019, %v1028
      %v1034 = vadd.f32 %v1020, %v1028
      %v1035 = vadd.f32 %v1021, %v1028
      %v1036 = vadd.f32 %v1022, %v1028
      %v1037 = vadd.f32 %v1023, %v1028
      %s1038 = scalar_lea.vmem %s3, 16
      %v1039 = vld [vmem:[%s1038] sm:$0xf]
      %s1040 = scalar_lea.vmem %s3, 20
      %v1041 = vld [vmem:[%s1040] sm:$0xf]
      %v1043 = vsel %vm510, %v474, 0
      %v1046 = vsel %vm510, %v475, 0
      %v1049 = vsel %vm510, %v476, 0
      %v1052 = vsel %vm510, %v477, 0
      %v1055 = vsel %vm510, %v478, 0
      %v1058 = vsel %vm510, %v479, 0
      %v1061 = vsel %vm510, %v480, 0
      %v1064 = vsel %vm510, %v481, 0
      %v1067 = vsel %vm535, %v1041, 0
      %1069 = vmatprep.subr.mxu0 0.0
      %1070 = vmatpush1.msra.mxu0 %v1067
      %1071 = vmatprep.subr.mxu0 0.0
      %1072 = vmatpush1.msra.mxu0 0.0
      %1073 = vmatprep.subr.mxu0 0.0
      %1074 = vmatpush1.msra.mxu0 0.0
      %1075 = vmatprep.subr.mxu0 0.0
      %1076 = vmatpush1.msra.mxu0 0.0
      %1077 = vmatprep.subr.mxu0 0.0
      %1078 = vmatpush1.msra.mxu0 0.0
      %1079 = vmatprep.subr.mxu0 0.0
      %1080 = vmatpush1.msra.mxu0 0.0
      %1081 = vmatprep.subr.mxu0 0.0
      %1082 = vmatpush1.msra.mxu0 0.0
      %1083 = vmatprep.subr.mxu0 0.0
      %1084 = vmatpush1.msra.mxu0 0.0
      %1085 = vmatprep.subr.mxu0 0.0
      %1086 = vmatpush1.msra.mxu0 0.0
      %1087 = vmatprep.subr.mxu0 0.0
      %1088 = vmatpush1.msra.mxu0 0.0
      %1089 = vmatprep.subr.mxu0 0.0
      %1090 = vmatpush1.msra.mxu0 0.0
      %1091 = vmatprep.subr.mxu0 0.0
      %1092 = vmatpush1.msra.mxu0 0.0
      %1093 = vmatprep.subr.mxu0 0.0
      %1094 = vmatpush1.msra.mxu0 0.0
      %1095 = vmatprep.subr.mxu0 0.0
      %1096 = vmatpush1.msra.mxu0 0.0
      %1097 = vmatprep.subr.mxu0 0.0
      %1098 = vmatpush1.msra.mxu0 0.0
      %1099 = vmatprep.subr.mxu0 0.0
      %1100 = vmatpush1.msra.mxu0 0.0
      %1101 = vmatprep.subr.mxu0 0.0
      %1102 = vmatpush1.msra.mxu0 0.0
      %1103 = vmatprep.subr.mxu0 0.0
      %1104 = vmatpush1.msra.mxu0 0.0
      %1105 = vmatprep.subr.mxu0 0.0
      %1106 = vmatpush1.msra.mxu0 0.0
      %1107 = vmatprep.subr.mxu0 0.0
      %1108 = vmatpush1.msra.mxu0 0.0
      %1109 = vmatprep.subr.mxu0 0.0
      %1110 = vmatpush1.msra.mxu0 0.0
      %1111 = vmatprep.subr.mxu0 0.0
      %1112 = vmatpush1.msra.mxu0 0.0
      %1113 = vmatprep.subr.mxu0 0.0
      %1114 = vmatpush1.msra.mxu0 0.0
      %1115 = vmatprep.subr.mxu0 0.0
      %1116 = vmatpush1.msra.mxu0 0.0
      %1117 = vmatprep.subr.mxu0 0.0
      %1118 = vmatpush1.msra.mxu0 0.0
      %1119 = vmatprep.subr.mxu0 0.0
      %1120 = vmatpush1.msra.mxu0 0.0
      %1121 = vmatprep.subr.mxu0 0.0
      %1122 = vmatpush1.msra.mxu0 0.0
      %1123 = vmatprep.subr.mxu0 0.0
      %1124 = vmatpush1.msra.mxu0 0.0
      %1125 = vmatprep.subr.mxu0 0.0
      %1126 = vmatpush1.msra.mxu0 0.0
      %1127 = vmatprep.subr.mxu0 0.0
      %1128 = vmatpush1.msra.mxu0 0.0
      %1129 = vmatprep.subr.mxu0 0.0
      %1130 = vmatpush1.msra.mxu0 0.0
      %1131 = vmatprep.subr.mxu0 0.0
      %1132 = vmatpush1.msra.mxu0 0.0
      %1133 = vmatprep.mubr.f32.mxu0 0.0
      %1134 = vmatmul.mubr.f32.gmra.mrb[0].mxu0 %v1043
      %v1135 = vpop.f32.mrb[0].mxu0
      %v1136 = vadd.f32 0.0, %v1135
      %v1137 = vpop.f32.mrb[0].mxu0
      %1138 = vmatprep.mubr.f32.mxu0 0.0
      %1139 = vmatmul.mubr.f32.gmra.mrb[0].mxu0 %v1046
      %v1140 = vpop.f32.mrb[0].mxu0
      %v1141 = vadd.f32 0.0, %v1140
      %v1142 = vpop.f32.mrb[0].mxu0
      %1143 = vmatprep.mubr.f32.mxu0 0.0
      %1144 = vmatmul.mubr.f32.gmra.mrb[0].mxu0 %v1049
      %v1145 = vpop.f32.mrb[0].mxu0
      %v1146 = vadd.f32 0.0, %v1145
      %v1147 = vpop.f32.mrb[0].mxu0
      %1148 = vmatprep.mubr.f32.mxu0 0.0
      %1149 = vmatmul.mubr.f32.gmra.mrb[0].mxu0 %v1052
      %v1150 = vpop.f32.mrb[0].mxu0
      %v1151 = vadd.f32 0.0, %v1150
      %v1152 = vpop.f32.mrb[0].mxu0
      %1153 = vmatprep.mubr.f32.mxu0 0.0
      %1154 = vmatmul.mubr.f32.gmra.mrb[0].mxu0 %v1055
      %v1155 = vpop.f32.mrb[0].mxu0
      %v1156 = vadd.f32 0.0, %v1155
      %v1157 = vpop.f32.mrb[0].mxu0
      %1158 = vmatprep.mubr.f32.mxu0 0.0
      %1159 = vmatmul.mubr.f32.gmra.mrb[0].mxu0 %v1058
      %v1160 = vpop.f32.mrb[0].mxu0
      %v1161 = vadd.f32 0.0, %v1160
      %v1162 = vpop.f32.mrb[0].mxu0
      %1163 = vmatprep.mubr.f32.mxu0 0.0
      %1164 = vmatmul.mubr.f32.gmra.mrb[0].mxu0 %v1061
      %v1165 = vpop.f32.mrb[0].mxu0
      %v1166 = vadd.f32 0.0, %v1165
      %v1167 = vpop.f32.mrb[0].mxu0
      %1168 = vmatprep.mubr.f32.mxu0 0.0
      %1169 = vmatmul.mubr.f32.gmra.mrb[0].mxu0 %v1064
      %v1170 = vpop.f32.mrb[0].mxu0
      %v1171 = vadd.f32 0.0, %v1170
      %v1172 = vpop.f32.mrb[0].mxu0
      %1173 = vdwg.mxu0
      %v1175 = vsel %vm535, %v1039, 0
      %1177 = vmatprep.subr.mxu0 0.0
      %1178 = vmatpush1.msra.mxu0 %v1175
      %1179 = vmatprep.subr.mxu0 0.0
      %1180 = vmatpush1.msra.mxu0 0.0
      %1181 = vmatprep.subr.mxu0 0.0
      %1182 = vmatpush1.msra.mxu0 0.0
      %1183 = vmatprep.subr.mxu0 0.0
      %1184 = vmatpush1.msra.mxu0 0.0
      %1185 = vmatprep.subr.mxu0 0.0
      %1186 = vmatpush1.msra.mxu0 0.0
      %1187 = vmatprep.subr.mxu0 0.0
      %1188 = vmatpush1.msra.mxu0 0.0
      %1189 = vmatprep.subr.mxu0 0.0
      %1190 = vmatpush1.msra.mxu0 0.0
      %1191 = vmatprep.subr.mxu0 0.0
      %1192 = vmatpush1.msra.mxu0 0.0
      %1193 = vmatprep.subr.mxu0 0.0
      %1194 = vmatpush1.msra.mxu0 0.0
      %1195 = vmatprep.subr.mxu0 0.0
      %1196 = vmatpush1.msra.mxu0 0.0
      %1197 = vmatprep.subr.mxu0 0.0
      %1198 = vmatpush1.msra.mxu0 0.0
      %1199 = vmatprep.subr.mxu0 0.0
      %1200 = vmatpush1.msra.mxu0 0.0
      %1201 = vmatprep.subr.mxu0 0.0
      %1202 = vmatpush1.msra.mxu0 0.0
      %1203 = vmatprep.subr.mxu0 0.0
      %1204 = vmatpush1.msra.mxu0 0.0
      %1205 = vmatprep.subr.mxu0 0.0
      %1206 = vmatpush1.msra.mxu0 0.0
      %1207 = vmatprep.subr.mxu0 0.0
      %1208 = vmatpush1.msra.mxu0 0.0
      %1209 = vmatprep.subr.mxu0 0.0
      %1210 = vmatpush1.msra.mxu0 0.0
      %1211 = vmatprep.subr.mxu0 0.0
      %1212 = vmatpush1.msra.mxu0 0.0
      %1213 = vmatprep.subr.mxu0 0.0
      %1214 = vmatpush1.msra.mxu0 0.0
      %1215 = vmatprep.subr.mxu0 0.0
      %1216 = vmatpush1.msra.mxu0 0.0
      %1217 = vmatprep.subr.mxu0 0.0
      %1218 = vmatpush1.msra.mxu0 0.0
      %1219 = vmatprep.subr.mxu0 0.0
      %1220 = vmatpush1.msra.mxu0 0.0
      %1221 = vmatprep.subr.mxu0 0.0
      %1222 = vmatpush1.msra.mxu0 0.0
      %1223 = vmatprep.subr.mxu0 0.0
      %1224 = vmatpush1.msra.mxu0 0.0
      %1225 = vmatprep.subr.mxu0 0.0
      %1226 = vmatpush1.msra.mxu0 0.0
      %1227 = vmatprep.subr.mxu0 0.0
      %1228 = vmatpush1.msra.mxu0 0.0
      %1229 = vmatprep.subr.mxu0 0.0
      %1230 = vmatpush1.msra.mxu0 0.0
      %1231 = vmatprep.subr.mxu0 0.0
      %1232 = vmatpush1.msra.mxu0 0.0
      %1233 = vmatprep.subr.mxu0 0.0
      %1234 = vmatpush1.msra.mxu0 0.0
      %1235 = vmatprep.subr.mxu0 0.0
      %1236 = vmatpush1.msra.mxu0 0.0
      %1237 = vmatprep.subr.mxu0 0.0
      %1238 = vmatpush1.msra.mxu0 0.0
      %1239 = vmatprep.subr.mxu0 0.0
      %1240 = vmatpush1.msra.mxu0 0.0
      %1241 = vmatprep.mubr.f32.mxu0 0.0
      %1242 = vmatmul.mubr.f32.gmra.mrb[0].mxu0 %v512
      %v1243 = vpop.f32.mrb[0].mxu0
      %v1244 = vadd.f32 %v1136, %v1243
      %v1245 = vpop.f32.mrb[0].mxu0
      %1246 = vmatprep.mubr.f32.mxu0 0.0
      %1247 = vmatmul.mubr.f32.gmra.mrb[0].mxu0 %v515
      %v1248 = vpop.f32.mrb[0].mxu0
      %v1249 = vadd.f32 %v1141, %v1248
      %v1250 = vpop.f32.mrb[0].mxu0
      %1251 = vmatprep.mubr.f32.mxu0 0.0
      %1252 = vmatmul.mubr.f32.gmra.mrb[0].mxu0 %v518
      %v1253 = vpop.f32.mrb[0].mxu0
      %v1254 = vadd.f32 %v1146, %v1253
      %v1255 = vpop.f32.mrb[0].mxu0
      %1256 = vmatprep.mubr.f32.mxu0 0.0
      %1257 = vmatmul.mubr.f32.gmra.mrb[0].mxu0 %v521
      %v1258 = vpop.f32.mrb[0].mxu0
      %v1259 = vadd.f32 %v1151, %v1258
      %v1260 = vpop.f32.mrb[0].mxu0
      %1261 = vmatprep.mubr.f32.mxu0 0.0
      %1262 = vmatmul.mubr.f32.gmra.mrb[0].mxu0 %v524
      %v1263 = vpop.f32.mrb[0].mxu0
      %v1264 = vadd.f32 %v1156, %v1263
      %v1265 = vpop.f32.mrb[0].mxu0
      %1266 = vmatprep.mubr.f32.mxu0 0.0
      %1267 = vmatmul.mubr.f32.gmra.mrb[0].mxu0 %v527
      %v1268 = vpop.f32.mrb[0].mxu0
      %v1269 = vadd.f32 %v1161, %v1268
      %v1270 = vpop.f32.mrb[0].mxu0
      %1271 = vmatprep.mubr.f32.mxu0 0.0
      %1272 = vmatmul.mubr.f32.gmra.mrb[0].mxu0 %v530
      %v1273 = vpop.f32.mrb[0].mxu0
      %v1274 = vadd.f32 %v1166, %v1273
      %v1275 = vpop.f32.mrb[0].mxu0
      %1276 = vmatprep.mubr.f32.mxu0 0.0
      %1277 = vmatmul.mubr.f32.gmra.mrb[0].mxu0 %v533
      %v1278 = vpop.f32.mrb[0].mxu0
      %v1279 = vadd.f32 %v1171, %v1278
      %v1280 = vpop.f32.mrb[0].mxu0
      %1281 = vdwg.mxu0
      %s1282 = scalar_lea.vmem %s3, 24
      %v1283 = vld [vmem:[%s1282] sm:$0xf]
      %v1285 = vsel %vm535, %v1283, 0
      %1287 = vmatprep.subr.mxu0 0.0
      %1288 = vmatpush1.msra.mxu0 %v1285
      %1289 = vmatprep.subr.mxu0 0.0
      %1290 = vmatpush1.msra.mxu0 0.0
      %1291 = vmatprep.subr.mxu0 0.0
      %1292 = vmatpush1.msra.mxu0 0.0
      %1293 = vmatprep.subr.mxu0 0.0
      %1294 = vmatpush1.msra.mxu0 0.0
      %1295 = vmatprep.subr.mxu0 0.0
      %1296 = vmatpush1.msra.mxu0 0.0
      %1297 = vmatprep.subr.mxu0 0.0
      %1298 = vmatpush1.msra.mxu0 0.0
      %1299 = vmatprep.subr.mxu0 0.0
      %1300 = vmatpush1.msra.mxu0 0.0
      %1301 = vmatprep.subr.mxu0 0.0
      %1302 = vmatpush1.msra.mxu0 0.0
      %1303 = vmatprep.subr.mxu0 0.0
      %1304 = vmatpush1.msra.mxu0 0.0
      %1305 = vmatprep.subr.mxu0 0.0
      %1306 = vmatpush1.msra.mxu0 0.0
      %1307 = vmatprep.subr.mxu0 0.0
      %1308 = vmatpush1.msra.mxu0 0.0
      %1309 = vmatprep.subr.mxu0 0.0
      %1310 = vmatpush1.msra.mxu0 0.0
      %1311 = vmatprep.subr.mxu0 0.0
      %1312 = vmatpush1.msra.mxu0 0.0
      %1313 = vmatprep.subr.mxu0 0.0
      %1314 = vmatpush1.msra.mxu0 0.0
      %1315 = vmatprep.subr.mxu0 0.0
      %1316 = vmatpush1.msra.mxu0 0.0
      %1317 = vmatprep.subr.mxu0 0.0
      %1318 = vmatpush1.msra.mxu0 0.0
      %1319 = vmatprep.subr.mxu0 0.0
      %1320 = vmatpush1.msra.mxu0 0.0
      %1321 = vmatprep.subr.mxu0 0.0
      %1322 = vmatpush1.msra.mxu0 0.0
      %1323 = vmatprep.subr.mxu0 0.0
      %1324 = vmatpush1.msra.mxu0 0.0
      %1325 = vmatprep.subr.mxu0 0.0
      %1326 = vmatpush1.msra.mxu0 0.0
      %1327 = vmatprep.subr.mxu0 0.0
      %1328 = vmatpush1.msra.mxu0 0.0
      %1329 = vmatprep.subr.mxu0 0.0
      %1330 = vmatpush1.msra.mxu0 0.0
      %1331 = vmatprep.subr.mxu0 0.0
      %1332 = vmatpush1.msra.mxu0 0.0
      %1333 = vmatprep.subr.mxu0 0.0
      %1334 = vmatpush1.msra.mxu0 0.0
      %1335 = vmatprep.subr.mxu0 0.0
      %1336 = vmatpush1.msra.mxu0 0.0
      %1337 = vmatprep.subr.mxu0 0.0
      %1338 = vmatpush1.msra.mxu0 0.0
      %1339 = vmatprep.subr.mxu0 0.0
      %1340 = vmatpush1.msra.mxu0 0.0
      %1341 = vmatprep.subr.mxu0 0.0
      %1342 = vmatpush1.msra.mxu0 0.0
      %1343 = vmatprep.subr.mxu0 0.0
      %1344 = vmatpush1.msra.mxu0 0.0
      %1345 = vmatprep.subr.mxu0 0.0
      %1346 = vmatpush1.msra.mxu0 0.0
      %1347 = vmatprep.subr.mxu0 0.0
      %1348 = vmatpush1.msra.mxu0 0.0
      %1349 = vmatprep.subr.mxu0 0.0
      %1350 = vmatpush1.msra.mxu0 0.0
      %1351 = vmatprep.mubr.f32.mxu0 0.0
      %1352 = vmatmul.mubr.f32.gmra.mrb[0].mxu0 %v518
      %v1353 = vpop.f32.mrb[0].mxu0
      %v1354 = vadd.f32 0.0, %v1353
      %v1355 = vpop.f32.mrb[0].mxu0
      %1356 = vmatprep.mubr.f32.mxu0 0.0
      %1357 = vmatmul.mubr.f32.gmra.mrb[0].mxu0 %v521
      %v1358 = vpop.f32.mrb[0].mxu0
      %v1359 = vadd.f32 0.0, %v1358
      %v1360 = vpop.f32.mrb[0].mxu0
      %1361 = vmatprep.mubr.f32.mxu0 0.0
      %1362 = vmatmul.mubr.f32.gmra.mrb[0].mxu0 %v524
      %v1363 = vpop.f32.mrb[0].mxu0
      %v1364 = vadd.f32 0.0, %v1363
      %v1365 = vpop.f32.mrb[0].mxu0
      %1366 = vmatprep.mubr.f32.mxu0 0.0
      %1367 = vmatmul.mubr.f32.gmra.mrb[0].mxu0 %v527
      %v1368 = vpop.f32.mrb[0].mxu0
      %v1369 = vadd.f32 0.0, %v1368
      %v1370 = vpop.f32.mrb[0].mxu0
      %1371 = vmatprep.mubr.f32.mxu0 0.0
      %1372 = vmatmul.mubr.f32.gmra.mrb[0].mxu0 %v530
      %v1373 = vpop.f32.mrb[0].mxu0
      %v1374 = vadd.f32 0.0, %v1373
      %v1375 = vpop.f32.mrb[0].mxu0
      %1376 = vmatprep.mubr.f32.mxu0 0.0
      %1377 = vmatmul.mubr.f32.gmra.mrb[0].mxu0 %v533
      %v1378 = vpop.f32.mrb[0].mxu0
      %v1379 = vadd.f32 0.0, %v1378
      %v1380 = vpop.f32.mrb[0].mxu0
      %1381 = vmatprep.mubr.f32.mxu0 0.0
      %1382 = vmatmul.mubr.f32.gmra.mrb[0].mxu0 %v903
      %v1383 = vpop.f32.mrb[0].mxu0
      %v1384 = vadd.f32 0.0, %v1383
      %v1385 = vpop.f32.mrb[0].mxu0
      %1386 = vmatprep.mubr.f32.mxu0 0.0
      %1387 = vmatmul.mubr.f32.gmra.mrb[0].mxu0 %v906
      %v1388 = vpop.f32.mrb[0].mxu0
      %v1389 = vadd.f32 0.0, %v1388
      %v1390 = vpop.f32.mrb[0].mxu0
      %1391 = vdwg.mxu0
      %v1392 = vadd.f32 %v1244, %v1354
      %v1393 = vadd.f32 %v1249, %v1359
      %v1394 = vadd.f32 %v1254, %v1364
      %v1395 = vadd.f32 %v1259, %v1369
      %v1396 = vadd.f32 %v1264, %v1374
      %v1397 = vadd.f32 %v1269, %v1379
      %v1398 = vadd.f32 %v1274, %v1384
      %v1399 = vadd.f32 %v1279, %v1389
      %s1400 = scalar_lea.vmem %s3, 28
      %v1401 = vld [vmem:[%s1400] sm:$0xf]
      %v1403 = vsel %vm510, %v492, 0
      %v1406 = vsel %vm510, %v493, 0
      %v1409 = vsel %vm535, %v1401, 0
      %1411 = vmatprep.subr.mxu0 0.0
      %1412 = vmatpush1.msra.mxu0 %v1409
      %1413 = vmatprep.subr.mxu0 0.0
      %1414 = vmatpush1.msra.mxu0 0.0
      %1415 = vmatprep.subr.mxu0 0.0
      %1416 = vmatpush1.msra.mxu0 0.0
      %1417 = vmatprep.subr.mxu0 0.0
      %1418 = vmatpush1.msra.mxu0 0.0
      %1419 = vmatprep.subr.mxu0 0.0
      %1420 = vmatpush1.msra.mxu0 0.0
      %1421 = vmatprep.subr.mxu0 0.0
      %1422 = vmatpush1.msra.mxu0 0.0
      %1423 = vmatprep.subr.mxu0 0.0
      %1424 = vmatpush1.msra.mxu0 0.0
      %1425 = vmatprep.subr.mxu0 0.0
      %1426 = vmatpush1.msra.mxu0 0.0
      %1427 = vmatprep.subr.mxu0 0.0
      %1428 = vmatpush1.msra.mxu0 0.0
      %1429 = vmatprep.subr.mxu0 0.0
      %1430 = vmatpush1.msra.mxu0 0.0
      %1431 = vmatprep.subr.mxu0 0.0
      %1432 = vmatpush1.msra.mxu0 0.0
      %1433 = vmatprep.subr.mxu0 0.0
      %1434 = vmatpush1.msra.mxu0 0.0
      %1435 = vmatprep.subr.mxu0 0.0
      %1436 = vmatpush1.msra.mxu0 0.0
      %1437 = vmatprep.subr.mxu0 0.0
      %1438 = vmatpush1.msra.mxu0 0.0
      %1439 = vmatprep.subr.mxu0 0.0
      %1440 = vmatpush1.msra.mxu0 0.0
      %1441 = vmatprep.subr.mxu0 0.0
      %1442 = vmatpush1.msra.mxu0 0.0
      %1443 = vmatprep.subr.mxu0 0.0
      %1444 = vmatpush1.msra.mxu0 0.0
      %1445 = vmatprep.subr.mxu0 0.0
      %1446 = vmatpush1.msra.mxu0 0.0
      %1447 = vmatprep.subr.mxu0 0.0
      %1448 = vmatpush1.msra.mxu0 0.0
      %1449 = vmatprep.subr.mxu0 0.0
      %1450 = vmatpush1.msra.mxu0 0.0
      %1451 = vmatprep.subr.mxu0 0.0
      %1452 = vmatpush1.msra.mxu0 0.0
      %1453 = vmatprep.subr.mxu0 0.0
      %1454 = vmatpush1.msra.mxu0 0.0
      %1455 = vmatprep.subr.mxu0 0.0
      %1456 = vmatpush1.msra.mxu0 0.0
      %1457 = vmatprep.subr.mxu0 0.0
      %1458 = vmatpush1.msra.mxu0 0.0
      %1459 = vmatprep.subr.mxu0 0.0
      %1460 = vmatpush1.msra.mxu0 0.0
      %1461 = vmatprep.subr.mxu0 0.0
      %1462 = vmatpush1.msra.mxu0 0.0
      %1463 = vmatprep.subr.mxu0 0.0
      %1464 = vmatpush1.msra.mxu0 0.0
      %1465 = vmatprep.subr.mxu0 0.0
      %1466 = vmatpush1.msra.mxu0 0.0
      %1467 = vmatprep.subr.mxu0 0.0
      %1468 = vmatpush1.msra.mxu0 0.0
      %1469 = vmatprep.subr.mxu0 0.0
      %1470 = vmatpush1.msra.mxu0 0.0
      %1471 = vmatprep.subr.mxu0 0.0
      %1472 = vmatpush1.msra.mxu0 0.0
      %1473 = vmatprep.subr.mxu0 0.0
      %1474 = vmatpush1.msra.mxu0 0.0
      %1475 = vmatprep.mubr.f32.mxu0 0.0
      %1476 = vmatmul.mubr.f32.gmra.mrb[0].mxu0 %v1049
      %v1477 = vpop.f32.mrb[0].mxu0
      %v1478 = vadd.f32 0.0, %v1477
      %v1479 = vpop.f32.mrb[0].mxu0
      %1480 = vmatprep.mubr.f32.mxu0 0.0
      %1481 = vmatmul.mubr.f32.gmra.mrb[0].mxu0 %v1052
      %v1482 = vpop.f32.mrb[0].mxu0
      %v1483 = vadd.f32 0.0, %v1482
      %v1484 = vpop.f32.mrb[0].mxu0
      %1485 = vmatprep.mubr.f32.mxu0 0.0
      %1486 = vmatmul.mubr.f32.gmra.mrb[0].mxu0 %v1055
      %v1487 = vpop.f32.mrb[0].mxu0
      %v1488 = vadd.f32 0.0, %v1487
      %v1489 = vpop.f32.mrb[0].mxu0
      %1490 = vmatprep.mubr.f32.mxu0 0.0
      %1491 = vmatmul.mubr.f32.gmra.mrb[0].mxu0 %v1058
      %v1492 = vpop.f32.mrb[0].mxu0
      %v1493 = vadd.f32 0.0, %v1492
      %v1494 = vpop.f32.mrb[0].mxu0
      %1495 = vmatprep.mubr.f32.mxu0 0.0
      %1496 = vmatmul.mubr.f32.gmra.mrb[0].mxu0 %v1061
      %v1497 = vpop.f32.mrb[0].mxu0
      %v1498 = vadd.f32 0.0, %v1497
      %v1499 = vpop.f32.mrb[0].mxu0
      %1500 = vmatprep.mubr.f32.mxu0 0.0
      %1501 = vmatmul.mubr.f32.gmra.mrb[0].mxu0 %v1064
      %v1502 = vpop.f32.mrb[0].mxu0
      %v1503 = vadd.f32 0.0, %v1502
      %v1504 = vpop.f32.mrb[0].mxu0
      %1505 = vmatprep.mubr.f32.mxu0 0.0
      %1506 = vmatmul.mubr.f32.gmra.mrb[0].mxu0 %v1403
      %v1507 = vpop.f32.mrb[0].mxu0
      %v1508 = vadd.f32 0.0, %v1507
      %v1509 = vpop.f32.mrb[0].mxu0
      %1510 = vmatprep.mubr.f32.mxu0 0.0
      %1511 = vmatmul.mubr.f32.gmra.mrb[0].mxu0 %v1406
      %v1512 = vpop.f32.mrb[0].mxu0
      %v1513 = vadd.f32 0.0, %v1512
      %v1514 = vpop.f32.mrb[0].mxu0
      %1515 = vdwg.mxu0
      %v1516 = vadd.f32 %v1392, %v1478
      %v1517 = vadd.f32 %v1393, %v1483
      %v1518 = vadd.f32 %v1394, %v1488
      %v1519 = vadd.f32 %v1395, %v1493
      %v1520 = vadd.f32 %v1396, %v1498
      %v1521 = vadd.f32 %v1397, %v1503
      %v1522 = vadd.f32 %v1398, %v1508
      %v1523 = vadd.f32 %v1399, %v1513
      %v1524 = vadd.f32 %v1516, %v1028
      %v1525 = vadd.f32 %v1517, %v1028
      %v1526 = vadd.f32 %v1518, %v1028
      %v1527 = vadd.f32 %v1519, %v1028
      %v1528 = vadd.f32 %v1520, %v1028
      %v1529 = vadd.f32 %v1521, %v1028
      %v1530 = vadd.f32 %v1522, %v1028
      %v1531 = vadd.f32 %v1523, %v1028
      %s1532 = scalar_lea.vmem %s3, 32
      %v1533 = vld [vmem:[%s1532] sm:$0xf]
      %s1534 = scalar_lea.vmem %s3, 36
      %v1535 = vld [vmem:[%s1534] sm:$0xf]
      %v1537 = vsel %vm535, %v1535, 0
      %1539 = vmatprep.subr.mxu0 0.0
      %1540 = vmatpush1.msra.mxu0 %v1537
      %1541 = vmatprep.subr.mxu0 0.0
      %1542 = vmatpush1.msra.mxu0 0.0
      %1543 = vmatprep.subr.mxu0 0.0
      %1544 = vmatpush1.msra.mxu0 0.0
      %1545 = vmatprep.subr.mxu0 0.0
      %1546 = vmatpush1.msra.mxu0 0.0
      %1547 = vmatprep.subr.mxu0 0.0
      %1548 = vmatpush1.msra.mxu0 0.0
      %1549 = vmatprep.subr.mxu0 0.0
      %1550 = vmatpush1.msra.mxu0 0.0
      %1551 = vmatprep.subr.mxu0 0.0
      %1552 = vmatpush1.msra.mxu0 0.0
      %1553 = vmatprep.subr.mxu0 0.0
      %1554 = vmatpush1.msra.mxu0 0.0
      %1555 = vmatprep.subr.mxu0 0.0
      %1556 = vmatpush1.msra.mxu0 0.0
      %1557 = vmatprep.subr.mxu0 0.0
      %1558 = vmatpush1.msra.mxu0 0.0
      %1559 = vmatprep.subr.mxu0 0.0
      %1560 = vmatpush1.msra.mxu0 0.0
      %1561 = vmatprep.subr.mxu0 0.0
      %1562 = vmatpush1.msra.mxu0 0.0
      %1563 = vmatprep.subr.mxu0 0.0
      %1564 = vmatpush1.msra.mxu0 0.0
      %1565 = vmatprep.subr.mxu0 0.0
      %1566 = vmatpush1.msra.mxu0 0.0
      %1567 = vmatprep.subr.mxu0 0.0
      %1568 = vmatpush1.msra.mxu0 0.0
      %1569 = vmatprep.subr.mxu0 0.0
      %1570 = vmatpush1.msra.mxu0 0.0
      %1571 = vmatprep.subr.mxu0 0.0
      %1572 = vmatpush1.msra.mxu0 0.0
      %1573 = vmatprep.subr.mxu0 0.0
      %1574 = vmatpush1.msra.mxu0 0.0
      %1575 = vmatprep.subr.mxu0 0.0
      %1576 = vmatpush1.msra.mxu0 0.0
      %1577 = vmatprep.subr.mxu0 0.0
      %1578 = vmatpush1.msra.mxu0 0.0
      %1579 = vmatprep.subr.mxu0 0.0
      %1580 = vmatpush1.msra.mxu0 0.0
      %1581 = vmatprep.subr.mxu0 0.0
      %1582 = vmatpush1.msra.mxu0 0.0
      %1583 = vmatprep.subr.mxu0 0.0
      %1584 = vmatpush1.msra.mxu0 0.0
      %1585 = vmatprep.subr.mxu0 0.0
      %1586 = vmatpush1.msra.mxu0 0.0
      %1587 = vmatprep.subr.mxu0 0.0
      %1588 = vmatpush1.msra.mxu0 0.0
      %1589 = vmatprep.subr.mxu0 0.0
      %1590 = vmatpush1.msra.mxu0 0.0
      %1591 = vmatprep.subr.mxu0 0.0
      %1592 = vmatpush1.msra.mxu0 0.0
      %1593 = vmatprep.subr.mxu0 0.0
      %1594 = vmatpush1.msra.mxu0 0.0
      %1595 = vmatprep.subr.mxu0 0.0
      %1596 = vmatpush1.msra.mxu0 0.0
      %1597 = vmatprep.subr.mxu0 0.0
      %1598 = vmatpush1.msra.mxu0 0.0
      %1599 = vmatprep.subr.mxu0 0.0
      %1600 = vmatpush1.msra.mxu0 0.0
      %1601 = vmatprep.subr.mxu0 0.0
      %1602 = vmatpush1.msra.mxu0 0.0
      %1603 = vmatprep.mubr.f32.mxu0 0.0
      %1604 = vmatmul.mubr.f32.gmra.mrb[0].mxu0 %v518
      %v1605 = vpop.f32.mrb[0].mxu0
      %v1606 = vadd.f32 0.0, %v1605
      %v1607 = vpop.f32.mrb[0].mxu0
      %1608 = vmatprep.mubr.f32.mxu0 0.0
      %1609 = vmatmul.mubr.f32.gmra.mrb[0].mxu0 %v521
      %v1610 = vpop.f32.mrb[0].mxu0
      %v1611 = vadd.f32 0.0, %v1610
      %v1612 = vpop.f32.mrb[0].mxu0
      %1613 = vmatprep.mubr.f32.mxu0 0.0
      %1614 = vmatmul.mubr.f32.gmra.mrb[0].mxu0 %v524
      %v1615 = vpop.f32.mrb[0].mxu0
      %v1616 = vadd.f32 0.0, %v1615
      %v1617 = vpop.f32.mrb[0].mxu0
      %1618 = vmatprep.mubr.f32.mxu0 0.0
      %1619 = vmatmul.mubr.f32.gmra.mrb[0].mxu0 %v527
      %v1620 = vpop.f32.mrb[0].mxu0
      %v1621 = vadd.f32 0.0, %v1620
      %v1622 = vpop.f32.mrb[0].mxu0
      %1623 = vmatprep.mubr.f32.mxu0 0.0
      %1624 = vmatmul.mubr.f32.gmra.mrb[0].mxu0 %v530
      %v1625 = vpop.f32.mrb[0].mxu0
      %v1626 = vadd.f32 0.0, %v1625
      %v1627 = vpop.f32.mrb[0].mxu0
      %1628 = vmatprep.mubr.f32.mxu0 0.0
      %1629 = vmatmul.mubr.f32.gmra.mrb[0].mxu0 %v533
      %v1630 = vpop.f32.mrb[0].mxu0
      %v1631 = vadd.f32 0.0, %v1630
      %v1632 = vpop.f32.mrb[0].mxu0
      %1633 = vmatprep.mubr.f32.mxu0 0.0
      %1634 = vmatmul.mubr.f32.gmra.mrb[0].mxu0 %v903
      %v1635 = vpop.f32.mrb[0].mxu0
      %v1636 = vadd.f32 0.0, %v1635
      %v1637 = vpop.f32.mrb[0].mxu0
      %1638 = vmatprep.mubr.f32.mxu0 0.0
      %1639 = vmatmul.mubr.f32.gmra.mrb[0].mxu0 %v906
      %v1640 = vpop.f32.mrb[0].mxu0
      %v1641 = vadd.f32 0.0, %v1640
      %v1642 = vpop.f32.mrb[0].mxu0
      %1643 = vdwg.mxu0
      %v1645 = vsel %vm535, %v1533, 0
      %1647 = vmatprep.subr.mxu0 0.0
      %1648 = vmatpush1.msra.mxu0 %v1645
      %1649 = vmatprep.subr.mxu0 0.0
      %1650 = vmatpush1.msra.mxu0 0.0
      %1651 = vmatprep.subr.mxu0 0.0
      %1652 = vmatpush1.msra.mxu0 0.0
      %1653 = vmatprep.subr.mxu0 0.0
      %1654 = vmatpush1.msra.mxu0 0.0
      %1655 = vmatprep.subr.mxu0 0.0
      %1656 = vmatpush1.msra.mxu0 0.0
      %1657 = vmatprep.subr.mxu0 0.0
      %1658 = vmatpush1.msra.mxu0 0.0
      %1659 = vmatprep.subr.mxu0 0.0
      %1660 = vmatpush1.msra.mxu0 0.0
      %1661 = vmatprep.subr.mxu0 0.0
      %1662 = vmatpush1.msra.mxu0 0.0
      %1663 = vmatprep.subr.mxu0 0.0
      %1664 = vmatpush1.msra.mxu0 0.0
      %1665 = vmatprep.subr.mxu0 0.0
      %1666 = vmatpush1.msra.mxu0 0.0
      %1667 = vmatprep.subr.mxu0 0.0
      %1668 = vmatpush1.msra.mxu0 0.0
      %1669 = vmatprep.subr.mxu0 0.0
      %1670 = vmatpush1.msra.mxu0 0.0
      %1671 = vmatprep.subr.mxu0 0.0
      %1672 = vmatpush1.msra.mxu0 0.0
      %1673 = vmatprep.subr.mxu0 0.0
      %1674 = vmatpush1.msra.mxu0 0.0
      %1675 = vmatprep.subr.mxu0 0.0
      %1676 = vmatpush1.msra.mxu0 0.0
      %1677 = vmatprep.subr.mxu0 0.0
      %1678 = vmatpush1.msra.mxu0 0.0
      %1679 = vmatprep.subr.mxu0 0.0
      %1680 = vmatpush1.msra.mxu0 0.0
      %1681 = vmatprep.subr.mxu0 0.0
      %1682 = vmatpush1.msra.mxu0 0.0
      %1683 = vmatprep.subr.mxu0 0.0
      %1684 = vmatpush1.msra.mxu0 0.0
      %1685 = vmatprep.subr.mxu0 0.0
      %1686 = vmatpush1.msra.mxu0 0.0
      %1687 = vmatprep.subr.mxu0 0.0
      %1688 = vmatpush1.msra.mxu0 0.0
      %1689 = vmatprep.subr.mxu0 0.0
      %1690 = vmatpush1.msra.mxu0 0.0
      %1691 = vmatprep.subr.mxu0 0.0
      %1692 = vmatpush1.msra.mxu0 0.0
      %1693 = vmatprep.subr.mxu0 0.0
      %1694 = vmatpush1.msra.mxu0 0.0
      %1695 = vmatprep.subr.mxu0 0.0
      %1696 = vmatpush1.msra.mxu0 0.0
      %1697 = vmatprep.subr.mxu0 0.0
      %1698 = vmatpush1.msra.mxu0 0.0
      %1699 = vmatprep.subr.mxu0 0.0
      %1700 = vmatpush1.msra.mxu0 0.0
      %1701 = vmatprep.subr.mxu0 0.0
      %1702 = vmatpush1.msra.mxu0 0.0
      %1703 = vmatprep.subr.mxu0 0.0
      %1704 = vmatpush1.msra.mxu0 0.0
      %1705 = vmatprep.subr.mxu0 0.0
      %1706 = vmatpush1.msra.mxu0 0.0
      %1707 = vmatprep.subr.mxu0 0.0
      %1708 = vmatpush1.msra.mxu0 0.0
      %1709 = vmatprep.subr.mxu0 0.0
      %1710 = vmatpush1.msra.mxu0 0.0
      %1711 = vmatprep.mubr.f32.mxu0 0.0
      %1712 = vmatmul.mubr.f32.gmra.mrb[0].mxu0 %v651
      %v1713 = vpop.f32.mrb[0].mxu0
      %v1714 = vadd.f32 %v1606, %v1713
      %v1715 = vpop.f32.mrb[0].mxu0
      %1716 = vmatprep.mubr.f32.mxu0 0.0
      %1717 = vmatmul.mubr.f32.gmra.mrb[0].mxu0 %v654
      %v1718 = vpop.f32.mrb[0].mxu0
      %v1719 = vadd.f32 %v1611, %v1718
      %v1720 = vpop.f32.mrb[0].mxu0
      %1721 = vmatprep.mubr.f32.mxu0 0.0
      %1722 = vmatmul.mubr.f32.gmra.mrb[0].mxu0 %v657
      %v1723 = vpop.f32.mrb[0].mxu0
      %v1724 = vadd.f32 %v1616, %v1723
      %v1725 = vpop.f32.mrb[0].mxu0
      %1726 = vmatprep.mubr.f32.mxu0 0.0
      %1727 = vmatmul.mubr.f32.gmra.mrb[0].mxu0 %v660
      %v1728 = vpop.f32.mrb[0].mxu0
      %v1729 = vadd.f32 %v1621, %v1728
      %v1730 = vpop.f32.mrb[0].mxu0
      %1731 = vmatprep.mubr.f32.mxu0 0.0
      %1732 = vmatmul.mubr.f32.gmra.mrb[0].mxu0 %v663
      %v1733 = vpop.f32.mrb[0].mxu0
      %v1734 = vadd.f32 %v1626, %v1733
      %v1735 = vpop.f32.mrb[0].mxu0
      %1736 = vmatprep.mubr.f32.mxu0 0.0
      %1737 = vmatmul.mubr.f32.gmra.mrb[0].mxu0 %v666
      %v1738 = vpop.f32.mrb[0].mxu0
      %v1739 = vadd.f32 %v1631, %v1738
      %v1740 = vpop.f32.mrb[0].mxu0
      %1741 = vmatprep.mubr.f32.mxu0 0.0
      %1742 = vmatmul.mubr.f32.gmra.mrb[0].mxu0 %v779
      %v1743 = vpop.f32.mrb[0].mxu0
      %v1744 = vadd.f32 %v1636, %v1743
      %v1745 = vpop.f32.mrb[0].mxu0
      %1746 = vmatprep.mubr.f32.mxu0 0.0
      %1747 = vmatmul.mubr.f32.gmra.mrb[0].mxu0 %v782
      %v1748 = vpop.f32.mrb[0].mxu0
      %v1749 = vadd.f32 %v1641, %v1748
      %v1750 = vpop.f32.mrb[0].mxu0
      %1751 = vdwg.mxu0
      %s1752 = scalar_lea.vmem %s3, 40
      %v1753 = vld [vmem:[%s1752] sm:$0xf]
      %v1755 = vsel %vm510, %v498, 0
      %v1758 = vsel %vm510, %v499, 0
      %v1761 = vsel %vm535, %v1753, 0
      %1763 = vmatprep.subr.mxu0 0.0
      %1764 = vmatpush1.msra.mxu0 %v1761
      %1765 = vmatprep.subr.mxu0 0.0
      %1766 = vmatpush1.msra.mxu0 0.0
      %1767 = vmatprep.subr.mxu0 0.0
      %1768 = vmatpush1.msra.mxu0 0.0
      %1769 = vmatprep.subr.mxu0 0.0
      %1770 = vmatpush1.msra.mxu0 0.0
      %1771 = vmatprep.subr.mxu0 0.0
      %1772 = vmatpush1.msra.mxu0 0.0
      %1773 = vmatprep.subr.mxu0 0.0
      %1774 = vmatpush1.msra.mxu0 0.0
      %1775 = vmatprep.subr.mxu0 0.0
      %1776 = vmatpush1.msra.mxu0 0.0
      %1777 = vmatprep.subr.mxu0 0.0
      %1778 = vmatpush1.msra.mxu0 0.0
      %1779 = vmatprep.subr.mxu0 0.0
      %1780 = vmatpush1.msra.mxu0 0.0
      %1781 = vmatprep.subr.mxu0 0.0
      %1782 = vmatpush1.msra.mxu0 0.0
      %1783 = vmatprep.subr.mxu0 0.0
      %1784 = vmatpush1.msra.mxu0 0.0
      %1785 = vmatprep.subr.mxu0 0.0
      %1786 = vmatpush1.msra.mxu0 0.0
      %1787 = vmatprep.subr.mxu0 0.0
      %1788 = vmatpush1.msra.mxu0 0.0
      %1789 = vmatprep.subr.mxu0 0.0
      %1790 = vmatpush1.msra.mxu0 0.0
      %1791 = vmatprep.subr.mxu0 0.0
      %1792 = vmatpush1.msra.mxu0 0.0
      %1793 = vmatprep.subr.mxu0 0.0
      %1794 = vmatpush1.msra.mxu0 0.0
      %1795 = vmatprep.subr.mxu0 0.0
      %1796 = vmatpush1.msra.mxu0 0.0
      %1797 = vmatprep.subr.mxu0 0.0
      %1798 = vmatpush1.msra.mxu0 0.0
      %1799 = vmatprep.subr.mxu0 0.0
      %1800 = vmatpush1.msra.mxu0 0.0
      %1801 = vmatprep.subr.mxu0 0.0
      %1802 = vmatpush1.msra.mxu0 0.0
      %1803 = vmatprep.subr.mxu0 0.0
      %1804 = vmatpush1.msra.mxu0 0.0
      %1805 = vmatprep.subr.mxu0 0.0
      %1806 = vmatpush1.msra.mxu0 0.0
      %1807 = vmatprep.subr.mxu0 0.0
      %1808 = vmatpush1.msra.mxu0 0.0
      %1809 = vmatprep.subr.mxu0 0.0
      %1810 = vmatpush1.msra.mxu0 0.0
      %1811 = vmatprep.subr.mxu0 0.0
      %1812 = vmatpush1.msra.mxu0 0.0
      %1813 = vmatprep.subr.mxu0 0.0
      %1814 = vmatpush1.msra.mxu0 0.0
      %1815 = vmatprep.subr.mxu0 0.0
      %1816 = vmatpush1.msra.mxu0 0.0
      %1817 = vmatprep.subr.mxu0 0.0
      %1818 = vmatpush1.msra.mxu0 0.0
      %1819 = vmatprep.subr.mxu0 0.0
      %1820 = vmatpush1.msra.mxu0 0.0
      %1821 = vmatprep.subr.mxu0 0.0
      %1822 = vmatpush1.msra.mxu0 0.0
      %1823 = vmatprep.subr.mxu0 0.0
      %1824 = vmatpush1.msra.mxu0 0.0
      %1825 = vmatprep.subr.mxu0 0.0
      %1826 = vmatpush1.msra.mxu0 0.0
      %1827 = vmatprep.mubr.f32.mxu0 0.0
      %1828 = vmatmul.mubr.f32.gmra.mrb[0].mxu0 %v657
      %v1829 = vpop.f32.mrb[0].mxu0
      %v1830 = vadd.f32 0.0, %v1829
      %v1831 = vpop.f32.mrb[0].mxu0
      %1832 = vmatprep.mubr.f32.mxu0 0.0
      %1833 = vmatmul.mubr.f32.gmra.mrb[0].mxu0 %v660
      %v1834 = vpop.f32.mrb[0].mxu0
      %v1835 = vadd.f32 0.0, %v1834
      %v1836 = vpop.f32.mrb[0].mxu0
      %1837 = vmatprep.mubr.f32.mxu0 0.0
      %1838 = vmatmul.mubr.f32.gmra.mrb[0].mxu0 %v663
      %v1839 = vpop.f32.mrb[0].mxu0
      %v1840 = vadd.f32 0.0, %v1839
      %v1841 = vpop.f32.mrb[0].mxu0
      %1842 = vmatprep.mubr.f32.mxu0 0.0
      %1843 = vmatmul.mubr.f32.gmra.mrb[0].mxu0 %v666
      %v1844 = vpop.f32.mrb[0].mxu0
      %v1845 = vadd.f32 0.0, %v1844
      %v1846 = vpop.f32.mrb[0].mxu0
      %1847 = vmatprep.mubr.f32.mxu0 0.0
      %1848 = vmatmul.mubr.f32.gmra.mrb[0].mxu0 %v779
      %v1849 = vpop.f32.mrb[0].mxu0
      %v1850 = vadd.f32 0.0, %v1849
      %v1851 = vpop.f32.mrb[0].mxu0
      %1852 = vmatprep.mubr.f32.mxu0 0.0
      %1853 = vmatmul.mubr.f32.gmra.mrb[0].mxu0 %v782
      %v1854 = vpop.f32.mrb[0].mxu0
      %v1855 = vadd.f32 0.0, %v1854
      %v1856 = vpop.f32.mrb[0].mxu0
      %1857 = vmatprep.mubr.f32.mxu0 0.0
      %1858 = vmatmul.mubr.f32.gmra.mrb[0].mxu0 %v1755
      %v1859 = vpop.f32.mrb[0].mxu0
      %v1860 = vadd.f32 0.0, %v1859
      %v1861 = vpop.f32.mrb[0].mxu0
      %1862 = vmatprep.mubr.f32.mxu0 0.0
      %1863 = vmatmul.mubr.f32.gmra.mrb[0].mxu0 %v1758
      %v1864 = vpop.f32.mrb[0].mxu0
      %v1865 = vadd.f32 0.0, %v1864
      %v1866 = vpop.f32.mrb[0].mxu0
      %1867 = vdwg.mxu0
      %v1868 = vadd.f32 %v1714, %v1830
      %v1869 = vadd.f32 %v1719, %v1835
      %v1870 = vadd.f32 %v1724, %v1840
      %v1871 = vadd.f32 %v1729, %v1845
      %v1872 = vadd.f32 %v1734, %v1850
      %v1873 = vadd.f32 %v1739, %v1855
      %v1874 = vadd.f32 %v1744, %v1860
      %v1875 = vadd.f32 %v1749, %v1865
      %s1876 = scalar_lea.vmem %s3, 44
      %v1877 = vld [vmem:[%s1876] sm:$0xf]
      %v1879 = vsel %vm510, %v415, 0
      %v1882 = vsel %vm510, %v416, 0
      %v1885 = vsel %vm535, %v1877, 0
      %1887 = vmatprep.subr.mxu0 0.0
      %1888 = vmatpush1.msra.mxu0 %v1885
      %1889 = vmatprep.subr.mxu0 0.0
      %1890 = vmatpush1.msra.mxu0 0.0
      %1891 = vmatprep.subr.mxu0 0.0
      %1892 = vmatpush1.msra.mxu0 0.0
      %1893 = vmatprep.subr.mxu0 0.0
      %1894 = vmatpush1.msra.mxu0 0.0
      %1895 = vmatprep.subr.mxu0 0.0
      %1896 = vmatpush1.msra.mxu0 0.0
      %1897 = vmatprep.subr.mxu0 0.0
      %1898 = vmatpush1.msra.mxu0 0.0
      %1899 = vmatprep.subr.mxu0 0.0
      %1900 = vmatpush1.msra.mxu0 0.0
      %1901 = vmatprep.subr.mxu0 0.0
      %1902 = vmatpush1.msra.mxu0 0.0
      %1903 = vmatprep.subr.mxu0 0.0
      %1904 = vmatpush1.msra.mxu0 0.0
      %1905 = vmatprep.subr.mxu0 0.0
      %1906 = vmatpush1.msra.mxu0 0.0
      %1907 = vmatprep.subr.mxu0 0.0
      %1908 = vmatpush1.msra.mxu0 0.0
      %1909 = vmatprep.subr.mxu0 0.0
      %1910 = vmatpush1.msra.mxu0 0.0
      %1911 = vmatprep.subr.mxu0 0.0
      %1912 = vmatpush1.msra.mxu0 0.0
      %1913 = vmatprep.subr.mxu0 0.0
      %1914 = vmatpush1.msra.mxu0 0.0
      %1915 = vmatprep.subr.mxu0 0.0
      %1916 = vmatpush1.msra.mxu0 0.0
      %1917 = vmatprep.subr.mxu0 0.0
      %1918 = vmatpush1.msra.mxu0 0.0
      %1919 = vmatprep.subr.mxu0 0.0
      %1920 = vmatpush1.msra.mxu0 0.0
      %1921 = vmatprep.subr.mxu0 0.0
      %1922 = vmatpush1.msra.mxu0 0.0
      %1923 = vmatprep.subr.mxu0 0.0
      %1924 = vmatpush1.msra.mxu0 0.0
      %1925 = vmatprep.subr.mxu0 0.0
      %1926 = vmatpush1.msra.mxu0 0.0
      %1927 = vmatprep.subr.mxu0 0.0
      %1928 = vmatpush1.msra.mxu0 0.0
      %1929 = vmatprep.subr.mxu0 0.0
      %1930 = vmatpush1.msra.mxu0 0.0
      %1931 = vmatprep.subr.mxu0 0.0
      %1932 = vmatpush1.msra.mxu0 0.0
      %1933 = vmatprep.subr.mxu0 0.0
      %1934 = vmatpush1.msra.mxu0 0.0
      %1935 = vmatprep.subr.mxu0 0.0
      %1936 = vmatpush1.msra.mxu0 0.0
      %1937 = vmatprep.subr.mxu0 0.0
      %1938 = vmatpush1.msra.mxu0 0.0
      %1939 = vmatprep.subr.mxu0 0.0
      %1940 = vmatpush1.msra.mxu0 0.0
      %1941 = vmatprep.subr.mxu0 0.0
      %1942 = vmatpush1.msra.mxu0 0.0
      %1943 = vmatprep.subr.mxu0 0.0
      %1944 = vmatpush1.msra.mxu0 0.0
      %1945 = vmatprep.subr.mxu0 0.0
      %1946 = vmatpush1.msra.mxu0 0.0
      %1947 = vmatprep.subr.mxu0 0.0
      %1948 = vmatpush1.msra.mxu0 0.0
      %1949 = vmatprep.subr.mxu0 0.0
      %1950 = vmatpush1.msra.mxu0 0.0
      %1951 = vmatprep.mubr.f32.mxu0 0.0
      %1952 = vmatmul.mubr.f32.gmra.mrb[0].mxu0 %v524
      %v1953 = vpop.f32.mrb[0].mxu0
      %v1954 = vadd.f32 0.0, %v1953
      %v1955 = vpop.f32.mrb[0].mxu0
      %1956 = vmatprep.mubr.f32.mxu0 0.0
      %1957 = vmatmul.mubr.f32.gmra.mrb[0].mxu0 %v527
      %v1958 = vpop.f32.mrb[0].mxu0
      %v1959 = vadd.f32 0.0, %v1958
      %v1960 = vpop.f32.mrb[0].mxu0
      %1961 = vmatprep.mubr.f32.mxu0 0.0
      %1962 = vmatmul.mubr.f32.gmra.mrb[0].mxu0 %v530
      %v1963 = vpop.f32.mrb[0].mxu0
      %v1964 = vadd.f32 0.0, %v1963
      %v1965 = vpop.f32.mrb[0].mxu0
      %1966 = vmatprep.mubr.f32.mxu0 0.0
      %1967 = vmatmul.mubr.f32.gmra.mrb[0].mxu0 %v533
      %v1968 = vpop.f32.mrb[0].mxu0
      %v1969 = vadd.f32 0.0, %v1968
      %v1970 = vpop.f32.mrb[0].mxu0
      %1971 = vmatprep.mubr.f32.mxu0 0.0
      %1972 = vmatmul.mubr.f32.gmra.mrb[0].mxu0 %v903
      %v1973 = vpop.f32.mrb[0].mxu0
      %v1974 = vadd.f32 0.0, %v1973
      %v1975 = vpop.f32.mrb[0].mxu0
      %1976 = vmatprep.mubr.f32.mxu0 0.0
      %1977 = vmatmul.mubr.f32.gmra.mrb[0].mxu0 %v906
      %v1978 = vpop.f32.mrb[0].mxu0
      %v1979 = vadd.f32 0.0, %v1978
      %v1980 = vpop.f32.mrb[0].mxu0
      %1981 = vmatprep.mubr.f32.mxu0 0.0
      %1982 = vmatmul.mubr.f32.gmra.mrb[0].mxu0 %v1879
      %v1983 = vpop.f32.mrb[0].mxu0
      %v1984 = vadd.f32 0.0, %v1983
      %v1985 = vpop.f32.mrb[0].mxu0
      %1986 = vmatprep.mubr.f32.mxu0 0.0
      %1987 = vmatmul.mubr.f32.gmra.mrb[0].mxu0 %v1882
      %v1988 = vpop.f32.mrb[0].mxu0
      %v1989 = vadd.f32 0.0, %v1988
      %v1990 = vpop.f32.mrb[0].mxu0
      %1991 = vdwg.mxu0
      %v1992 = vadd.f32 %v1868, %v1954
      %v1993 = vadd.f32 %v1869, %v1959
      %v1994 = vadd.f32 %v1870, %v1964
      %v1995 = vadd.f32 %v1871, %v1969
      %v1996 = vadd.f32 %v1872, %v1974
      %v1997 = vadd.f32 %v1873, %v1979
      %v1998 = vadd.f32 %v1874, %v1984
      %v1999 = vadd.f32 %v1875, %v1989
      %v2000 = vadd.f32 %v1992, %v1028
      %v2001 = vadd.f32 %v1993, %v1028
      %v2002 = vadd.f32 %v1994, %v1028
      %v2003 = vadd.f32 %v1995, %v1028
      %v2004 = vadd.f32 %v1996, %v1028
      %v2005 = vadd.f32 %v1997, %v1028
      %v2006 = vadd.f32 %v1998, %v1028
      %v2007 = vadd.f32 %v1999, %v1028
      %s2008 = scalar_lea.vmem %s3, 48
      %v2009 = vld [vmem:[%s2008] sm:$0xf]
      %s2010 = scalar_lea.vmem %s3, 52
      %v2011 = vld [vmem:[%s2010] sm:$0xf]
      %v2013 = vsel %vm535, %v2011, 0
      %2015 = vmatprep.subr.mxu0 0.0
      %2016 = vmatpush1.msra.mxu0 %v2013
      %2017 = vmatprep.subr.mxu0 0.0
      %2018 = vmatpush1.msra.mxu0 0.0
      %2019 = vmatprep.subr.mxu0 0.0
      %2020 = vmatpush1.msra.mxu0 0.0
      %2021 = vmatprep.subr.mxu0 0.0
      %2022 = vmatpush1.msra.mxu0 0.0
      %2023 = vmatprep.subr.mxu0 0.0
      %2024 = vmatpush1.msra.mxu0 0.0
      %2025 = vmatprep.subr.mxu0 0.0
      %2026 = vmatpush1.msra.mxu0 0.0
      %2027 = vmatprep.subr.mxu0 0.0
      %2028 = vmatpush1.msra.mxu0 0.0
      %2029 = vmatprep.subr.mxu0 0.0
      %2030 = vmatpush1.msra.mxu0 0.0
      %2031 = vmatprep.subr.mxu0 0.0
      %2032 = vmatpush1.msra.mxu0 0.0
      %2033 = vmatprep.subr.mxu0 0.0
      %2034 = vmatpush1.msra.mxu0 0.0
      %2035 = vmatprep.subr.mxu0 0.0
      %2036 = vmatpush1.msra.mxu0 0.0
      %2037 = vmatprep.subr.mxu0 0.0
      %2038 = vmatpush1.msra.mxu0 0.0
      %2039 = vmatprep.subr.mxu0 0.0
      %2040 = vmatpush1.msra.mxu0 0.0
      %2041 = vmatprep.subr.mxu0 0.0
      %2042 = vmatpush1.msra.mxu0 0.0
      %2043 = vmatprep.subr.mxu0 0.0
      %2044 = vmatpush1.msra.mxu0 0.0
      %2045 = vmatprep.subr.mxu0 0.0
      %2046 = vmatpush1.msra.mxu0 0.0
      %2047 = vmatprep.subr.mxu0 0.0
      %2048 = vmatpush1.msra.mxu0 0.0
      %2049 = vmatprep.subr.mxu0 0.0
      %2050 = vmatpush1.msra.mxu0 0.0
      %2051 = vmatprep.subr.mxu0 0.0
      %2052 = vmatpush1.msra.mxu0 0.0
      %2053 = vmatprep.subr.mxu0 0.0
      %2054 = vmatpush1.msra.mxu0 0.0
      %2055 = vmatprep.subr.mxu0 0.0
      %2056 = vmatpush1.msra.mxu0 0.0
      %2057 = vmatprep.subr.mxu0 0.0
      %2058 = vmatpush1.msra.mxu0 0.0
      %2059 = vmatprep.subr.mxu0 0.0
      %2060 = vmatpush1.msra.mxu0 0.0
      %2061 = vmatprep.subr.mxu0 0.0
      %2062 = vmatpush1.msra.mxu0 0.0
      %2063 = vmatprep.subr.mxu0 0.0
      %2064 = vmatpush1.msra.mxu0 0.0
      %2065 = vmatprep.subr.mxu0 0.0
      %2066 = vmatpush1.msra.mxu0 0.0
      %2067 = vmatprep.subr.mxu0 0.0
      %2068 = vmatpush1.msra.mxu0 0.0
      %2069 = vmatprep.subr.mxu0 0.0
      %2070 = vmatpush1.msra.mxu0 0.0
      %2071 = vmatprep.subr.mxu0 0.0
      %2072 = vmatpush1.msra.mxu0 0.0
      %2073 = vmatprep.subr.mxu0 0.0
      %2074 = vmatpush1.msra.mxu0 0.0
      %2075 = vmatprep.subr.mxu0 0.0
      %2076 = vmatpush1.msra.mxu0 0.0
      %2077 = vmatprep.subr.mxu0 0.0
      %2078 = vmatpush1.msra.mxu0 0.0
      %2079 = vmatprep.mubr.f32.mxu0 0.0
      %2080 = vmatmul.mubr.f32.gmra.mrb[0].mxu0 %v1049
      %v2081 = vpop.f32.mrb[0].mxu0
      %v2082 = vadd.f32 0.0, %v2081
      %v2083 = vpop.f32.mrb[0].mxu0
      %2084 = vmatprep.mubr.f32.mxu0 0.0
      %2085 = vmatmul.mubr.f32.gmra.mrb[0].mxu0 %v1052
      %v2086 = vpop.f32.mrb[0].mxu0
      %v2087 = vadd.f32 0.0, %v2086
      %v2088 = vpop.f32.mrb[0].mxu0
      %2089 = vmatprep.mubr.f32.mxu0 0.0
      %2090 = vmatmul.mubr.f32.gmra.mrb[0].mxu0 %v1055
      %v2091 = vpop.f32.mrb[0].mxu0
      %v2092 = vadd.f32 0.0, %v2091
      %v2093 = vpop.f32.mrb[0].mxu0
      %2094 = vmatprep.mubr.f32.mxu0 0.0
      %2095 = vmatmul.mubr.f32.gmra.mrb[0].mxu0 %v1058
      %v2096 = vpop.f32.mrb[0].mxu0
      %v2097 = vadd.f32 0.0, %v2096
      %v2098 = vpop.f32.mrb[0].mxu0
      %2099 = vmatprep.mubr.f32.mxu0 0.0
      %2100 = vmatmul.mubr.f32.gmra.mrb[0].mxu0 %v1061
      %v2101 = vpop.f32.mrb[0].mxu0
      %v2102 = vadd.f32 0.0, %v2101
      %v2103 = vpop.f32.mrb[0].mxu0
      %2104 = vmatprep.mubr.f32.mxu0 0.0
      %2105 = vmatmul.mubr.f32.gmra.mrb[0].mxu0 %v1064
      %v2106 = vpop.f32.mrb[0].mxu0
      %v2107 = vadd.f32 0.0, %v2106
      %v2108 = vpop.f32.mrb[0].mxu0
      %2109 = vmatprep.mubr.f32.mxu0 0.0
      %2110 = vmatmul.mubr.f32.gmra.mrb[0].mxu0 %v1403
      %v2111 = vpop.f32.mrb[0].mxu0
      %v2112 = vadd.f32 0.0, %v2111
      %v2113 = vpop.f32.mrb[0].mxu0
      %2114 = vmatprep.mubr.f32.mxu0 0.0
      %2115 = vmatmul.mubr.f32.gmra.mrb[0].mxu0 %v1406
      %v2116 = vpop.f32.mrb[0].mxu0
      %v2117 = vadd.f32 0.0, %v2116
      %v2118 = vpop.f32.mrb[0].mxu0
      %2119 = vdwg.mxu0
      %v2121 = vsel %vm535, %v2009, 0
      %2123 = vmatprep.subr.mxu0 0.0
      %2124 = vmatpush1.msra.mxu0 %v2121
      %2125 = vmatprep.subr.mxu0 0.0
      %2126 = vmatpush1.msra.mxu0 0.0
      %2127 = vmatprep.subr.mxu0 0.0
      %2128 = vmatpush1.msra.mxu0 0.0
      %2129 = vmatprep.subr.mxu0 0.0
      %2130 = vmatpush1.msra.mxu0 0.0
      %2131 = vmatprep.subr.mxu0 0.0
      %2132 = vmatpush1.msra.mxu0 0.0
      %2133 = vmatprep.subr.mxu0 0.0
      %2134 = vmatpush1.msra.mxu0 0.0
      %2135 = vmatprep.subr.mxu0 0.0
      %2136 = vmatpush1.msra.mxu0 0.0
      %2137 = vmatprep.subr.mxu0 0.0
      %2138 = vmatpush1.msra.mxu0 0.0
      %2139 = vmatprep.subr.mxu0 0.0
      %2140 = vmatpush1.msra.mxu0 0.0
      %2141 = vmatprep.subr.mxu0 0.0
      %2142 = vmatpush1.msra.mxu0 0.0
      %2143 = vmatprep.subr.mxu0 0.0
      %2144 = vmatpush1.msra.mxu0 0.0
      %2145 = vmatprep.subr.mxu0 0.0
      %2146 = vmatpush1.msra.mxu0 0.0
      %2147 = vmatprep.subr.mxu0 0.0
      %2148 = vmatpush1.msra.mxu0 0.0
      %2149 = vmatprep.subr.mxu0 0.0
      %2150 = vmatpush1.msra.mxu0 0.0
      %2151 = vmatprep.subr.mxu0 0.0
      %2152 = vmatpush1.msra.mxu0 0.0
      %2153 = vmatprep.subr.mxu0 0.0
      %2154 = vmatpush1.msra.mxu0 0.0
      %2155 = vmatprep.subr.mxu0 0.0
      %2156 = vmatpush1.msra.mxu0 0.0
      %2157 = vmatprep.subr.mxu0 0.0
      %2158 = vmatpush1.msra.mxu0 0.0
      %2159 = vmatprep.subr.mxu0 0.0
      %2160 = vmatpush1.msra.mxu0 0.0
      %2161 = vmatprep.subr.mxu0 0.0
      %2162 = vmatpush1.msra.mxu0 0.0
      %2163 = vmatprep.subr.mxu0 0.0
      %2164 = vmatpush1.msra.mxu0 0.0
      %2165 = vmatprep.subr.mxu0 0.0
      %2166 = vmatpush1.msra.mxu0 0.0
      %2167 = vmatprep.subr.mxu0 0.0
      %2168 = vmatpush1.msra.mxu0 0.0
      %2169 = vmatprep.subr.mxu0 0.0
      %2170 = vmatpush1.msra.mxu0 0.0
      %2171 = vmatprep.subr.mxu0 0.0
      %2172 = vmatpush1.msra.mxu0 0.0
      %2173 = vmatprep.subr.mxu0 0.0
      %2174 = vmatpush1.msra.mxu0 0.0
      %2175 = vmatprep.subr.mxu0 0.0
      %2176 = vmatpush1.msra.mxu0 0.0
      %2177 = vmatprep.subr.mxu0 0.0
      %2178 = vmatpush1.msra.mxu0 0.0
      %2179 = vmatprep.subr.mxu0 0.0
      %2180 = vmatpush1.msra.mxu0 0.0
      %2181 = vmatprep.subr.mxu0 0.0
      %2182 = vmatpush1.msra.mxu0 0.0
      %2183 = vmatprep.subr.mxu0 0.0
      %2184 = vmatpush1.msra.mxu0 0.0
      %2185 = vmatprep.subr.mxu0 0.0
      %2186 = vmatpush1.msra.mxu0 0.0
      %2187 = vmatprep.mubr.f32.mxu0 0.0
      %2188 = vmatmul.mubr.f32.gmra.mrb[0].mxu0 %v518
      %v2189 = vpop.f32.mrb[0].mxu0
      %v2190 = vadd.f32 %v2082, %v2189
      %v2191 = vpop.f32.mrb[0].mxu0
      %2192 = vmatprep.mubr.f32.mxu0 0.0
      %2193 = vmatmul.mubr.f32.gmra.mrb[0].mxu0 %v521
      %v2194 = vpop.f32.mrb[0].mxu0
      %v2195 = vadd.f32 %v2087, %v2194
      %v2196 = vpop.f32.mrb[0].mxu0
      %2197 = vmatprep.mubr.f32.mxu0 0.0
      %2198 = vmatmul.mubr.f32.gmra.mrb[0].mxu0 %v524
      %v2199 = vpop.f32.mrb[0].mxu0
      %v2200 = vadd.f32 %v2092, %v2199
      %v2201 = vpop.f32.mrb[0].mxu0
      %2202 = vmatprep.mubr.f32.mxu0 0.0
      %2203 = vmatmul.mubr.f32.gmra.mrb[0].mxu0 %v527
      %v2204 = vpop.f32.mrb[0].mxu0
      %v2205 = vadd.f32 %v2097, %v2204
      %v2206 = vpop.f32.mrb[0].mxu0
      %2207 = vmatprep.mubr.f32.mxu0 0.0
      %2208 = vmatmul.mubr.f32.gmra.mrb[0].mxu0 %v530
      %v2209 = vpop.f32.mrb[0].mxu0
      %v2210 = vadd.f32 %v2102, %v2209
      %v2211 = vpop.f32.mrb[0].mxu0
      %2212 = vmatprep.mubr.f32.mxu0 0.0
      %2213 = vmatmul.mubr.f32.gmra.mrb[0].mxu0 %v533
      %v2214 = vpop.f32.mrb[0].mxu0
      %v2215 = vadd.f32 %v2107, %v2214
      %v2216 = vpop.f32.mrb[0].mxu0
      %2217 = vmatprep.mubr.f32.mxu0 0.0
      %2218 = vmatmul.mubr.f32.gmra.mrb[0].mxu0 %v903
      %v2219 = vpop.f32.mrb[0].mxu0
      %v2220 = vadd.f32 %v2112, %v2219
      %v2221 = vpop.f32.mrb[0].mxu0
      %2222 = vmatprep.mubr.f32.mxu0 0.0
      %2223 = vmatmul.mubr.f32.gmra.mrb[0].mxu0 %v906
      %v2224 = vpop.f32.mrb[0].mxu0
      %v2225 = vadd.f32 %v2117, %v2224
      %v2226 = vpop.f32.mrb[0].mxu0
      %2227 = vdwg.mxu0
      %s2228 = scalar_lea.vmem %s3, 56
      %v2229 = vld [vmem:[%s2228] sm:$0xf]
      %v2231 = vsel %vm535, %v2229, 0
      %2233 = vmatprep.subr.mxu0 0.0
      %2234 = vmatpush1.msra.mxu0 %v2231
      %2235 = vmatprep.subr.mxu0 0.0
      %2236 = vmatpush1.msra.mxu0 0.0
      %2237 = vmatprep.subr.mxu0 0.0
      %2238 = vmatpush1.msra.mxu0 0.0
      %2239 = vmatprep.subr.mxu0 0.0
      %2240 = vmatpush1.msra.mxu0 0.0
      %2241 = vmatprep.subr.mxu0 0.0
      %2242 = vmatpush1.msra.mxu0 0.0
      %2243 = vmatprep.subr.mxu0 0.0
      %2244 = vmatpush1.msra.mxu0 0.0
      %2245 = vmatprep.subr.mxu0 0.0
      %2246 = vmatpush1.msra.mxu0 0.0
      %2247 = vmatprep.subr.mxu0 0.0
      %2248 = vmatpush1.msra.mxu0 0.0
      %2249 = vmatprep.subr.mxu0 0.0
      %2250 = vmatpush1.msra.mxu0 0.0
      %2251 = vmatprep.subr.mxu0 0.0
      %2252 = vmatpush1.msra.mxu0 0.0
      %2253 = vmatprep.subr.mxu0 0.0
      %2254 = vmatpush1.msra.mxu0 0.0
      %2255 = vmatprep.subr.mxu0 0.0
      %2256 = vmatpush1.msra.mxu0 0.0
      %2257 = vmatprep.subr.mxu0 0.0
      %2258 = vmatpush1.msra.mxu0 0.0
      %2259 = vmatprep.subr.mxu0 0.0
      %2260 = vmatpush1.msra.mxu0 0.0
      %2261 = vmatprep.subr.mxu0 0.0
      %2262 = vmatpush1.msra.mxu0 0.0
      %2263 = vmatprep.subr.mxu0 0.0
      %2264 = vmatpush1.msra.mxu0 0.0
      %2265 = vmatprep.subr.mxu0 0.0
      %2266 = vmatpush1.msra.mxu0 0.0
      %2267 = vmatprep.subr.mxu0 0.0
      %2268 = vmatpush1.msra.mxu0 0.0
      %2269 = vmatprep.subr.mxu0 0.0
      %2270 = vmatpush1.msra.mxu0 0.0
      %2271 = vmatprep.subr.mxu0 0.0
      %2272 = vmatpush1.msra.mxu0 0.0
      %2273 = vmatprep.subr.mxu0 0.0
      %2274 = vmatpush1.msra.mxu0 0.0
      %2275 = vmatprep.subr.mxu0 0.0
      %2276 = vmatpush1.msra.mxu0 0.0
      %2277 = vmatprep.subr.mxu0 0.0
      %2278 = vmatpush1.msra.mxu0 0.0
      %2279 = vmatprep.subr.mxu0 0.0
      %2280 = vmatpush1.msra.mxu0 0.0
      %2281 = vmatprep.subr.mxu0 0.0
      %2282 = vmatpush1.msra.mxu0 0.0
      %2283 = vmatprep.subr.mxu0 0.0
      %2284 = vmatpush1.msra.mxu0 0.0
      %2285 = vmatprep.subr.mxu0 0.0
      %2286 = vmatpush1.msra.mxu0 0.0
      %2287 = vmatprep.subr.mxu0 0.0
      %2288 = vmatpush1.msra.mxu0 0.0
      %2289 = vmatprep.subr.mxu0 0.0
      %2290 = vmatpush1.msra.mxu0 0.0
      %2291 = vmatprep.subr.mxu0 0.0
      %2292 = vmatpush1.msra.mxu0 0.0
      %2293 = vmatprep.subr.mxu0 0.0
      %2294 = vmatpush1.msra.mxu0 0.0
      %2295 = vmatprep.subr.mxu0 0.0
      %2296 = vmatpush1.msra.mxu0 0.0
      %2297 = vmatprep.mubr.f32.mxu0 0.0
      %2298 = vmatmul.mubr.f32.gmra.mrb[0].mxu0 %v524
      %v2299 = vpop.f32.mrb[0].mxu0
      %v2300 = vadd.f32 0.0, %v2299
      %v2301 = vpop.f32.mrb[0].mxu0
      %2302 = vmatprep.mubr.f32.mxu0 0.0
      %2303 = vmatmul.mubr.f32.gmra.mrb[0].mxu0 %v527
      %v2304 = vpop.f32.mrb[0].mxu0
      %v2305 = vadd.f32 0.0, %v2304
      %v2306 = vpop.f32.mrb[0].mxu0
      %2307 = vmatprep.mubr.f32.mxu0 0.0
      %2308 = vmatmul.mubr.f32.gmra.mrb[0].mxu0 %v530
      %v2309 = vpop.f32.mrb[0].mxu0
      %v2310 = vadd.f32 0.0, %v2309
      %v2311 = vpop.f32.mrb[0].mxu0
      %2312 = vmatprep.mubr.f32.mxu0 0.0
      %2313 = vmatmul.mubr.f32.gmra.mrb[0].mxu0 %v533
      %v2314 = vpop.f32.mrb[0].mxu0
      %v2315 = vadd.f32 0.0, %v2314
      %v2316 = vpop.f32.mrb[0].mxu0
      %2317 = vmatprep.mubr.f32.mxu0 0.0
      %2318 = vmatmul.mubr.f32.gmra.mrb[0].mxu0 %v903
      %v2319 = vpop.f32.mrb[0].mxu0
      %v2320 = vadd.f32 0.0, %v2319
      %v2321 = vpop.f32.mrb[0].mxu0
      %2322 = vmatprep.mubr.f32.mxu0 0.0
      %2323 = vmatmul.mubr.f32.gmra.mrb[0].mxu0 %v906
      %v2324 = vpop.f32.mrb[0].mxu0
      %v2325 = vadd.f32 0.0, %v2324
      %v2326 = vpop.f32.mrb[0].mxu0
      %2327 = vmatprep.mubr.f32.mxu0 0.0
      %2328 = vmatmul.mubr.f32.gmra.mrb[0].mxu0 %v1879
      %v2329 = vpop.f32.mrb[0].mxu0
      %v2330 = vadd.f32 0.0, %v2329
      %v2331 = vpop.f32.mrb[0].mxu0
      %2332 = vmatprep.mubr.f32.mxu0 0.0
      %2333 = vmatmul.mubr.f32.gmra.mrb[0].mxu0 %v1882
      %v2334 = vpop.f32.mrb[0].mxu0
      %v2335 = vadd.f32 0.0, %v2334
      %v2336 = vpop.f32.mrb[0].mxu0
      %2337 = vdwg.mxu0
      %v2338 = vadd.f32 %v2190, %v2300
      %v2339 = vadd.f32 %v2195, %v2305
      %v2340 = vadd.f32 %v2200, %v2310
      %v2341 = vadd.f32 %v2205, %v2315
      %v2342 = vadd.f32 %v2210, %v2320
      %v2343 = vadd.f32 %v2215, %v2325
      %v2344 = vadd.f32 %v2220, %v2330
      %v2345 = vadd.f32 %v2225, %v2335
      %s2346 = scalar_lea.vmem %s3, 60
      %v2347 = vld [vmem:[%s2346] sm:$0xf]
      %v2349 = vsel %vm510, %v504, 0
      %v2352 = vsel %vm510, %v505, 0
      %v2355 = vsel %vm535, %v2347, 0
      %2357 = vmatprep.subr.mxu0 0.0
      %2358 = vmatpush1.msra.mxu0 %v2355
      %2359 = vmatprep.subr.mxu0 0.0
      %2360 = vmatpush1.msra.mxu0 0.0
      %2361 = vmatprep.subr.mxu0 0.0
      %2362 = vmatpush1.msra.mxu0 0.0
      %2363 = vmatprep.subr.mxu0 0.0
      %2364 = vmatpush1.msra.mxu0 0.0
      %2365 = vmatprep.subr.mxu0 0.0
      %2366 = vmatpush1.msra.mxu0 0.0
      %2367 = vmatprep.subr.mxu0 0.0
      %2368 = vmatpush1.msra.mxu0 0.0
      %2369 = vmatprep.subr.mxu0 0.0
      %2370 = vmatpush1.msra.mxu0 0.0
      %2371 = vmatprep.subr.mxu0 0.0
      %2372 = vmatpush1.msra.mxu0 0.0
      %2373 = vmatprep.subr.mxu0 0.0
      %2374 = vmatpush1.msra.mxu0 0.0
      %2375 = vmatprep.subr.mxu0 0.0
      %2376 = vmatpush1.msra.mxu0 0.0
      %2377 = vmatprep.subr.mxu0 0.0
      %2378 = vmatpush1.msra.mxu0 0.0
      %2379 = vmatprep.subr.mxu0 0.0
      %2380 = vmatpush1.msra.mxu0 0.0
      %2381 = vmatprep.subr.mxu0 0.0
      %2382 = vmatpush1.msra.mxu0 0.0
      %2383 = vmatprep.subr.mxu0 0.0
      %2384 = vmatpush1.msra.mxu0 0.0
      %2385 = vmatprep.subr.mxu0 0.0
      %2386 = vmatpush1.msra.mxu0 0.0
      %2387 = vmatprep.subr.mxu0 0.0
      %2388 = vmatpush1.msra.mxu0 0.0
      %2389 = vmatprep.subr.mxu0 0.0
      %2390 = vmatpush1.msra.mxu0 0.0
      %2391 = vmatprep.subr.mxu0 0.0
      %2392 = vmatpush1.msra.mxu0 0.0
      %2393 = vmatprep.subr.mxu0 0.0
      %2394 = vmatpush1.msra.mxu0 0.0
      %2395 = vmatprep.subr.mxu0 0.0
      %2396 = vmatpush1.msra.mxu0 0.0
      %2397 = vmatprep.subr.mxu0 0.0
      %2398 = vmatpush1.msra.mxu0 0.0
      %2399 = vmatprep.subr.mxu0 0.0
      %2400 = vmatpush1.msra.mxu0 0.0
      %2401 = vmatprep.subr.mxu0 0.0
      %2402 = vmatpush1.msra.mxu0 0.0
      %2403 = vmatprep.subr.mxu0 0.0
      %2404 = vmatpush1.msra.mxu0 0.0
      %2405 = vmatprep.subr.mxu0 0.0
      %2406 = vmatpush1.msra.mxu0 0.0
      %2407 = vmatprep.subr.mxu0 0.0
      %2408 = vmatpush1.msra.mxu0 0.0
      %2409 = vmatprep.subr.mxu0 0.0
      %2410 = vmatpush1.msra.mxu0 0.0
      %2411 = vmatprep.subr.mxu0 0.0
      %2412 = vmatpush1.msra.mxu0 0.0
      %2413 = vmatprep.subr.mxu0 0.0
      %2414 = vmatpush1.msra.mxu0 0.0
      %2415 = vmatprep.subr.mxu0 0.0
      %2416 = vmatpush1.msra.mxu0 0.0
      %2417 = vmatprep.subr.mxu0 0.0
      %2418 = vmatpush1.msra.mxu0 0.0
      %2419 = vmatprep.subr.mxu0 0.0
      %2420 = vmatpush1.msra.mxu0 0.0
      %2421 = vmatprep.mubr.f32.mxu0 0.0
      %2422 = vmatmul.mubr.f32.gmra.mrb[0].mxu0 %v1055
      %v2423 = vpop.f32.mrb[0].mxu0
      %v2424 = vadd.f32 0.0, %v2423
      %v2425 = vpop.f32.mrb[0].mxu0
      %2426 = vmatprep.mubr.f32.mxu0 0.0
      %2427 = vmatmul.mubr.f32.gmra.mrb[0].mxu0 %v1058
      %v2428 = vpop.f32.mrb[0].mxu0
      %v2429 = vadd.f32 0.0, %v2428
      %v2430 = vpop.f32.mrb[0].mxu0
      %2431 = vmatprep.mubr.f32.mxu0 0.0
      %2432 = vmatmul.mubr.f32.gmra.mrb[0].mxu0 %v1061
      %v2433 = vpop.f32.mrb[0].mxu0
      %v2434 = vadd.f32 0.0, %v2433
      %v2435 = vpop.f32.mrb[0].mxu0
      %2436 = vmatprep.mubr.f32.mxu0 0.0
      %2437 = vmatmul.mubr.f32.gmra.mrb[0].mxu0 %v1064
      %v2438 = vpop.f32.mrb[0].mxu0
      %v2439 = vadd.f32 0.0, %v2438
      %v2440 = vpop.f32.mrb[0].mxu0
      %2441 = vmatprep.mubr.f32.mxu0 0.0
      %2442 = vmatmul.mubr.f32.gmra.mrb[0].mxu0 %v1403
      %v2443 = vpop.f32.mrb[0].mxu0
      %v2444 = vadd.f32 0.0, %v2443
      %v2445 = vpop.f32.mrb[0].mxu0
      %2446 = vmatprep.mubr.f32.mxu0 0.0
      %2447 = vmatmul.mubr.f32.gmra.mrb[0].mxu0 %v1406
      %v2448 = vpop.f32.mrb[0].mxu0
      %v2449 = vadd.f32 0.0, %v2448
      %v2450 = vpop.f32.mrb[0].mxu0
      %2451 = vmatprep.mubr.f32.mxu0 0.0
      %2452 = vmatmul.mubr.f32.gmra.mrb[0].mxu0 %v2349
      %v2453 = vpop.f32.mrb[0].mxu0
      %v2454 = vadd.f32 0.0, %v2453
      %v2455 = vpop.f32.mrb[0].mxu0
      %2456 = vmatprep.mubr.f32.mxu0 0.0
      %2457 = vmatmul.mubr.f32.gmra.mrb[0].mxu0 %v2352
      %v2458 = vpop.f32.mrb[0].mxu0
      %v2459 = vadd.f32 0.0, %v2458
      %v2460 = vpop.f32.mrb[0].mxu0
      %2461 = vdwg.mxu0
      %v2462 = vadd.f32 %v2338, %v2424
      %v2463 = vadd.f32 %v2339, %v2429
      %v2464 = vadd.f32 %v2340, %v2434
      %v2465 = vadd.f32 %v2341, %v2439
      %v2466 = vadd.f32 %v2342, %v2444
      %v2467 = vadd.f32 %v2343, %v2449
      %v2468 = vadd.f32 %v2344, %v2454
      %v2469 = vadd.f32 %v2345, %v2459
      %v2470 = vadd.f32 %v2462, %v1028
      %v2471 = vadd.f32 %v2463, %v1028
      %v2472 = vadd.f32 %v2464, %v1028
      %v2473 = vadd.f32 %v2465, %v1028
      %v2474 = vadd.f32 %v2466, %v1028
      %v2475 = vadd.f32 %v2467, %v1028
      %v2476 = vadd.f32 %v2468, %v1028
      %v2477 = vadd.f32 %v2469, %v1028
      %2486 = vrot.lane.b32.xlu0 %v1524, 4
      %v2487 = vpop.permute.xlu0 %2486
      %2488 = vrot.lane.b32.xlu0 %v1525, 4
      %v2489 = vpop.permute.xlu0 %2488
      %2490 = vrot.lane.b32.xlu0 %v1526, 4
      %v2491 = vpop.permute.xlu0 %2490
      %2492 = vrot.lane.b32.xlu0 %v1527, 4
      %v2493 = vpop.permute.xlu0 %2492
      %2494 = vrot.lane.b32.xlu0 %v1528, 4
      %v2495 = vpop.permute.xlu0 %2494
      %2496 = vrot.lane.b32.xlu0 %v1529, 4
      %v2497 = vpop.permute.xlu0 %2496
      %2498 = vrot.lane.b32.xlu0 %v1530, 4
      %v2499 = vpop.permute.xlu0 %2498
      %2500 = vrot.lane.b32.xlu0 %v1531, 4
      %v2501 = vpop.permute.xlu0 %2500
      %v2510 = vsel %vm510, %v1030, %v2487
      %v2511 = vsel %vm510, %v1031, %v2489
      %v2512 = vsel %vm510, %v1032, %v2491
      %v2513 = vsel %vm510, %v1033, %v2493
      %v2514 = vsel %vm510, %v1034, %v2495
      %v2515 = vsel %vm510, %v1035, %v2497
      %v2516 = vsel %vm510, %v1036, %v2499
      %v2517 = vsel %vm510, %v1037, %v2501
      %vm2518 = vcmask 64512
      %2519 = vst.msk [vmem:[%s391] sm:$0xff] %vm2518, %v2510
      %2520 = vst.msk [vmem:[%s391 + $0x8] sm:$0xff] %vm2518, %v2511
      %2521 = vst.msk [vmem:[%s391 + $0x20] sm:$0xff] %vm2518, %v2512
      %2522 = vst.msk [vmem:[%s391 + $0x28] sm:$0xff] %vm2518, %v2513
      %2523 = vst.msk [vmem:[%s391 + $0x40] sm:$0xff] %vm2518, %v2514
      %2524 = vst.msk [vmem:[%s391 + $0x48] sm:$0xff] %vm2518, %v2515
      %2525 = vst.msk [vmem:[%s391 + $0x60] sm:$0xff] %vm2518, %v2516
      %2526 = vst.msk [vmem:[%s391 + $0x68] sm:$0xff] %vm2518, %v2517
      %2535 = vrot.lane.b32.xlu0 %v2470, 4
      %v2536 = vpop.permute.xlu0 %2535
      %2537 = vrot.lane.b32.xlu0 %v2471, 4
      %v2538 = vpop.permute.xlu0 %2537
      %2539 = vrot.lane.b32.xlu0 %v2472, 4
      %v2540 = vpop.permute.xlu0 %2539
      %2541 = vrot.lane.b32.xlu0 %v2473, 4
      %v2542 = vpop.permute.xlu0 %2541
      %2543 = vrot.lane.b32.xlu0 %v2474, 4
      %v2544 = vpop.permute.xlu0 %2543
      %2545 = vrot.lane.b32.xlu0 %v2475, 4
      %v2546 = vpop.permute.xlu0 %2545
      %2547 = vrot.lane.b32.xlu0 %v2476, 4
      %v2548 = vpop.permute.xlu0 %2547
      %2549 = vrot.lane.b32.xlu0 %v2477, 4
      %v2550 = vpop.permute.xlu0 %2549
      %v2559 = vsel %vm510, %v2000, %v2536
      %v2560 = vsel %vm510, %v2001, %v2538
      %v2561 = vsel %vm510, %v2002, %v2540
      %v2562 = vsel %vm510, %v2003, %v2542
      %v2563 = vsel %vm510, %v2004, %v2544
      %v2564 = vsel %vm510, %v2005, %v2546
      %v2565 = vsel %vm510, %v2006, %v2548
      %v2566 = vsel %vm510, %v2007, %v2550
      %s2567 = scalar_lea.vmem %s391, 16
      %2568 = vst.msk [vmem:[%s2567] sm:$0xff] %vm2518, %v2559
      %2569 = vst.msk [vmem:[%s2567 + $0x8] sm:$0xff] %vm2518, %v2560
      %2570 = vst.msk [vmem:[%s2567 + $0x20] sm:$0xff] %vm2518, %v2561
      %2571 = vst.msk [vmem:[%s2567 + $0x28] sm:$0xff] %vm2518, %v2562
      %2572 = vst.msk [vmem:[%s2567 + $0x40] sm:$0xff] %vm2518, %v2563
      %2573 = vst.msk [vmem:[%s2567 + $0x48] sm:$0xff] %vm2518, %v2564
      %2574 = vst.msk [vmem:[%s2567 + $0x60] sm:$0xff] %vm2518, %v2565
      %2575 = vst.msk [vmem:[%s2567 + $0x68] sm:$0xff] %vm2518, %v2566
      %s2576 = smul.u32 4, %s21
      %p2577 = scmp.lt.s32.totalorder %s20, 1
      %s2578 = scalar_select %p2577, %s20, 1
      %p2579 = scmp.lt.s32.totalorder %s2576, 15
      %s2580 = scalar_select %p2579, %s2576, 15
      %s2581 = smul.addr %s2580, 4
      %s2582 = smul.addr %s2578, 64
      %s2583 = sadd.s32 %s2581, %s2582
      %s2584 = smul.addr %s2583, 8
      %s2585 = scalar_lea.vmem %s5, %s2584
      // Predicated region
      $region41: #{tpu_custom_call.1} parent=39 // pred_check
        %p2586 = pneg %p190
      $region42: #{tpu_custom_call.1} parent=39 // pred_check_branch
        %2588 = sbr.rel (%p2586) target = $region44
      $region43: #{tpu_custom_call.1} parent=39 // pred_region
        %s2589 = smul.u32 4, %s21
      $region44: #{tpu_custom_call.1} parent=39 // pred_fallthru
        _
    $region40: #{tpu_custom_call.1} parent=5 // pred_fallthru
      _
    %p2590 = scmp.le.s32.totalorder 2, %s11
    // Predicated region
    $region45: #{tpu_custom_call.1} parent=5 // pred_check
      %p2591 = pneg %p2590
    $region46: #{tpu_custom_call.1} parent=5 // pred_check_branch
      %2593 = sbr.rel (%p2591) target = $region48
    $region47: #{tpu_custom_call.1} parent=5 // pred_region
      %s2594 = ssub.s32 %s11, 2
      // Predicated region
      $region49: #{tpu_custom_call.1} parent=47 // pred_check
        %p2595 = pneg %p196
      $region50: #{tpu_custom_call.1} parent=47 // pred_check_branch
        %2597 = sbr.rel (%p2595) target = $region52
      $region51: #{tpu_custom_call.1} parent=47 // pred_region
        %s2598 = smul.u32 4, %s23
        %p2599 = scmp.lt.s32.totalorder %s22, 1
        %s2600 = scalar_select %p2599, %s22, 1
        %p2601 = scmp.lt.s32.totalorder %s2598, 15
        %s2602 = scalar_select %p2601, %s2598, 15
        %s2603 = smul.addr %s2602, 4
        %s2604 = smul.addr %s2600, 64
        %s2605 = sadd.s32 %s2603, %s2604
        %s2606 = smul.addr %s2605, 8
        %s2607 = scalar_lea.vmem %s5, %s2606
      $region52: #{tpu_custom_call.1} parent=47 // pred_fallthru
        _
    $region48: #{tpu_custom_call.1} parent=5 // pred_fallthru
      _
  $region6: #{tpu_custom_call.1} parent=0 // loop_footer
    %s15 = sadd.s32 1, %s11
  $region7: #{tpu_custom_call.1} parent=0 // loop_footer_branch
    %10 = sbr.rel target = $region3
  $region8: #{tpu_custom_call.1} parent=0 // loop_exit
    _

</llo_original>
